<compile_context>
chip_gen: v5e
topology: v5e:2x2
jax: 0.10.0
libtpu: 0.0.40
codegen_flags: <defaults>
</compile_context>

<pallas_src>
import jax
import jax.numpy as jnp
from jax import lax
from jax.experimental import pallas as pl
from jax.experimental.pallas import tpu as pltpu

_LEAKY_SLOPE = 0.01   # PyTorch nn.LeakyReLU default
_OUT_LANES = 128      # lane-dense padding of the 3-wide output head


def _leaky_relu(x, slope=_LEAKY_SLOPE):
    return jnp.where(x >= 0, x, slope * x)


def _round_up(x, m):
    return (x + m - 1) // m * m


def decoder_fc_axis_kernel(x_ref, w1_ref, b1_ref, w2_ref, b2_ref,
                           w3_ref, b3_ref, o_ref, acc_ref):
    b = pl.program_id(1)
    num_b = pl.num_programs(1)

    # x_ref: (1, TILE_N, D) bf16 tile
    x = x_ref[0]

    # --- MLP on the MXU (bf16 inputs, f32 accumulation) ----------------------
    h = jnp.dot(x, w1_ref[...], preferred_element_type=jnp.float32) + b1_ref[...]
    h = _leaky_relu(h)
    h = jnp.dot(h.astype(jnp.bfloat16), w2_ref[...],
                preferred_element_type=jnp.float32) + b2_ref[...]
    h = _leaky_relu(h)
    y = jnp.dot(h.astype(jnp.bfloat16), w3_ref[...],
                preferred_element_type=jnp.float32) + b3_ref[...]
    # y: (TILE_N, 128); columns >= 3 are exactly zero (zero-padded W3/b3).

    # --- per-row L2 normalize: rsqrt(max(sum y^2, 1e-16)) == 1/max(||y||,1e-8)
    s = jnp.sum(y * y, axis=-1, keepdims=True)
    y = y * lax.rsqrt(jnp.maximum(s, 1e-16))

    # --- accumulate over the batch (reduction) grid axis ----------------------
    @pl.when(b == 0)
    def _init():
        acc_ref[...] = jnp.zeros_like(acc_ref)

    acc_ref[...] = acc_ref[...] + y

    # --- finalize: normalize the batch sum, one wide lane-dense store ---------
    @pl.when(b == num_b - 1)
    def _finalize():
        a = acc_ref[...]
        s2 = jnp.sum(a * a, axis=-1, keepdims=True)
        o_ref[...] = (a * lax.rsqrt(jnp.maximum(s2, 1e-16))).astype(o_ref.dtype)


def decoder_fc_axis(x, params, *, tile_n=512):
    """x: (B, N, latent_dim) float32.  Returns (N, 3) float32."""
    w1, b1, w2, b2, w3, b3 = params
    B, N, D = x.shape
    f1 = w1.shape[1]
    f2 = w2.shape[1]

    # Tile the point dimension; pad N to a multiple of the tile (padded rows are
    # independent points and are sliced off at the end — they never mix with the
    # batch reduction).
    tile_n = min(tile_n, _round_up(N, 8))
    n_pad = _round_up(N, tile_n)
    if n_pad != N:
        x = jnp.pad(x, ((0, 0), (0, n_pad - N), (0, 0)))

    # bf16 for all matmul operands; biases stay f32.
    x_bf = x.astype(jnp.bfloat16)
    w1_bf = w1.astype(jnp.bfloat16)
    w2_bf = w2.astype(jnp.bfloat16)

    # Lane-pad the 3-wide head to 128 columns (zeros don't change the L2 norm).
    w3_pad = jnp.zeros((f2, _OUT_LANES), jnp.float32).at[:, :3].set(w3)
    b3_pad = jnp.zeros((1, _OUT_LANES), jnp.float32).at[0, :3].set(b3)
    w3_bf = w3_pad.astype(jnp.bfloat16)

    b1_2d = b1.reshape(1, f1).astype(jnp.float32)
    b2_2d = b2.reshape(1, f2).astype(jnp.float32)

    grid = (n_pad // tile_n, B)

    out = pl.pallas_call(
        decoder_fc_axis_kernel,
        out_shape=jax.ShapeDtypeStruct((n_pad, _OUT_LANES), jnp.float32),
        grid_spec=pltpu.PrefetchScalarGridSpec(
            num_scalar_prefetch=0,
            grid=grid,
            in_specs=[
                # x: streamed (1, TILE_N, D) tiles, double-buffered by Pallas.
                pl.BlockSpec((1, tile_n, D), lambda n, b: (b, n, 0)),
                # Weights/biases: full blocks, constant index -> stay resident.
                pl.BlockSpec((D, f1), lambda n, b: (0, 0)),
                pl.BlockSpec((1, f1), lambda n, b: (0, 0)),
                pl.BlockSpec((f1, f2), lambda n, b: (0, 0)),
                pl.BlockSpec((1, f2), lambda n, b: (0, 0)),
                pl.BlockSpec((f2, _OUT_LANES), lambda n, b: (0, 0)),
                pl.BlockSpec((1, _OUT_LANES), lambda n, b: (0, 0)),
            ],
            out_specs=pl.BlockSpec((tile_n, _OUT_LANES), lambda n, b: (n, 0)),
            scratch_shapes=[pltpu.VMEM((tile_n, _OUT_LANES), jnp.float32)],
        ),
        compiler_params=pltpu.CompilerParams(
            dimension_semantics=("parallel", "arbitrary"),
            vmem_limit_bytes=32 * 1024 * 1024,  # fits v5e/v6e/v7x with headroom
        ),
    )(x_bf, w1_bf, b1_2d, w2_bf, b2_2d, w3_bf, b3_pad)

    return out[:N, :3]


def init_params(key, latent_dim, n_features):
    """Deterministic PyTorch-Linear-style init (uniform +-1/sqrt(fan_in))."""
    dims = [latent_dim] + list(n_features) + [3]
    params = []
    for i in range(len(dims) - 1):
        fan_in, fan_out = dims[i], dims[i + 1]
        key, kw, kb = jax.random.split(key, 3)
        bound = 1.0 / jnp.sqrt(jnp.float32(fan_in))
        w = jax.random.uniform(kw, (fan_in, fan_out), jnp.float32, -bound, bound)
        b = jax.random.uniform(kb, (fan_out,), jnp.float32, -bound, bound)
        params += [w, b]
    return tuple(params)


def decoder_fc_axis_ref(x, params, *, matmul_dtype=jnp.bfloat16):
    """Pure-JAX reference mirroring the PyTorch forward.

    Uses the same bf16 matmul inputs as the kernel so the comparison isolates
    kernel correctness rather than bf16-vs-f32 casting error.
    """
    w1, b1, w2, b2, w3, b3 = params

    def mm(a, w):
        return jnp.dot(a.astype(matmul_dtype), w.astype(matmul_dtype),
                       preferred_element_type=jnp.float32)

    h = _leaky_relu(mm(x, w1) + b1)
    h = _leaky_relu(mm(h, w2) + b2)
    y = mm(h, w3) + b3
    y = y / jnp.maximum(jnp.linalg.norm(y, axis=-1, keepdims=True), 1e-8)
    y = y.sum(0)
    y = y / jnp.maximum(jnp.linalg.norm(y, axis=-1, keepdims=True), 1e-8)
    return y


# TODO(synk): the bn=True (nn.BatchNorm1d) branch of the module is not
# implemented; the kernel reproduces the default bn=False forward pass.

if __name__ == "__main__":
    # Module defaults: latent_dim=128, n_features=(256, 256); small point count
    # (N=200 deliberately not a multiple of the tile to exercise padding).
    B, N = 2, 200
    latent_dim = 128
    n_features = (256, 256)

    key = jax.random.PRNGKey(0)
    key, kx = jax.random.split(key)
    x = jax.random.normal(kx, (B, N, latent_dim), jnp.float32)
    params = init_params(key, latent_dim, n_features)

    out = decoder_fc_axis(x, params, tile_n=128)
    out = jax.block_until_ready(out)

    ref = decoder_fc_axis_ref(x, params)
    assert out.shape == (N, 3), out.shape
    err = float(jnp.max(jnp.abs(out - ref)))
    assert err < 2e-2, f"max abs err {err}"
    print("KERNEL_OK")
</pallas_src>

<mosaic_0001>
module attributes {stable_mosaic.version = 11 : i64} {
  func.func @decoder_fc_axis_kernel(%arg0: i32, %arg1: i32, %arg2: memref<1x128x128xbf16, #tpu.memory_space<vmem>>, %arg3: memref<128x256xbf16, #tpu.memory_space<vmem>>, %arg4: memref<1x256xf32, #tpu.memory_space<vmem>>, %arg5: memref<256x256xbf16, #tpu.memory_space<vmem>>, %arg6: memref<1x256xf32, #tpu.memory_space<vmem>>, %arg7: memref<256x128xbf16, #tpu.memory_space<vmem>>, %arg8: memref<1x128xf32, #tpu.memory_space<vmem>>, %arg9: memref<128x128xf32, #tpu.memory_space<vmem>>, %arg10: memref<128x128xf32, #tpu.memory_space<vmem>>) attributes {dimension_semantics = [#tpu.dimension_semantics<parallel>, #tpu.dimension_semantics<arbitrary>], iteration_bounds = array<i64: 2, 2>, scalar_prefetch = 0 : i64, scratch_operands = 1 : i64, tpu.core_type = #tpu.core_type<tc>, window_params = [{transform_indices = @transform_0, window_bounds = array<i64: 1, 128, 128>}, {pipeline_mode = #tpu.pipeline_mode<synchronous>, transform_indices = @transform_1, window_bounds = array<i64: 128, 256>}, {pipeline_mode = #tpu.pipeline_mode<synchronous>, transform_indices = @transform_2, window_bounds = array<i64: 1, 256>}, {pipeline_mode = #tpu.pipeline_mode<synchronous>, transform_indices = @transform_3, window_bounds = array<i64: 256, 256>}, {pipeline_mode = #tpu.pipeline_mode<synchronous>, transform_indices = @transform_4, window_bounds = array<i64: 1, 256>}, {pipeline_mode = #tpu.pipeline_mode<synchronous>, transform_indices = @transform_5, window_bounds = array<i64: 256, 128>}, {pipeline_mode = #tpu.pipeline_mode<synchronous>, transform_indices = @transform_6, window_bounds = array<i64: 1, 128>}, {transform_indices = @transform_7, window_bounds = array<i64: 128, 128>}]} {
    %c0 = arith.constant 0 : index
    %c0_0 = arith.constant 0 : index
    %c0_1 = arith.constant 0 : index
    %0 = vector.load %arg2[%c0, %c0_0, %c0_1] : memref<1x128x128xbf16, #tpu.memory_space<vmem>>, vector<1x128x128xbf16>
    %1 = vector.shape_cast %0 : vector<1x128x128xbf16> to vector<128x128xbf16>
    %c0_2 = arith.constant 0 : index
    %c0_3 = arith.constant 0 : index
    %2 = vector.load %arg3[%c0_2, %c0_3] : memref<128x256xbf16, #tpu.memory_space<vmem>>, vector<128x256xbf16>
    %cst = arith.constant dense<0.000000e+00> : vector<128x256xf32>
    %3 = tpu.matmul %1, %2, %cst {dimension_numbers = #tpu.dot_dimension_numbers<[1], [0], [0], [1], [0, 0, 1, 1], [], []>} : vector<128x128xbf16>, vector<128x256xbf16>, vector<128x256xf32> -> vector<128x256xf32>
    %c0_4 = arith.constant 0 : index
    %c0_5 = arith.constant 0 : index
    %4 = vector.load %arg4[%c0_4, %c0_5] : memref<1x256xf32, #tpu.memory_space<vmem>>, vector<1x256xf32>
    %5 = vector.broadcast %4 : vector<1x256xf32> to vector<128x256xf32>
    %6 = arith.addf %3, %5 : vector<128x256xf32>
    %cst_6 = arith.constant 0.000000e+00 : f32
    %7 = vector.broadcast %cst_6 : f32 to vector<128x256xf32>
    %8 = arith.cmpf oge, %6, %7 : vector<128x256xf32>
    %cst_7 = arith.constant 0.00999999977 : f32
    %9 = vector.broadcast %cst_7 : f32 to vector<128x256xf32>
    %10 = arith.mulf %9, %6 : vector<128x256xf32>
    %11 = arith.select %8, %6, %10 : vector<128x256xi1>, vector<128x256xf32>
    %12 = arith.truncf %11 : vector<128x256xf32> to vector<128x256xbf16>
    %c0_8 = arith.constant 0 : index
    %c0_9 = arith.constant 0 : index
    %13 = vector.load %arg5[%c0_8, %c0_9] : memref<256x256xbf16, #tpu.memory_space<vmem>>, vector<256x256xbf16>
    %cst_10 = arith.constant dense<0.000000e+00> : vector<128x256xf32>
    %14 = tpu.matmul %12, %13, %cst_10 {dimension_numbers = #tpu.dot_dimension_numbers<[1], [0], [0], [1], [0, 0, 1, 1], [], []>} : vector<128x256xbf16>, vector<256x256xbf16>, vector<128x256xf32> -> vector<128x256xf32>
    %c0_11 = arith.constant 0 : index
    %c0_12 = arith.constant 0 : index
    %15 = vector.load %arg6[%c0_11, %c0_12] : memref<1x256xf32, #tpu.memory_space<vmem>>, vector<1x256xf32>
    %16 = vector.broadcast %15 : vector<1x256xf32> to vector<128x256xf32>
    %17 = arith.addf %14, %16 : vector<128x256xf32>
    %cst_13 = arith.constant 0.000000e+00 : f32
    %18 = vector.broadcast %cst_13 : f32 to vector<128x256xf32>
    %19 = arith.cmpf oge, %17, %18 : vector<128x256xf32>
    %cst_14 = arith.constant 0.00999999977 : f32
    %20 = vector.broadcast %cst_14 : f32 to vector<128x256xf32>
    %21 = arith.mulf %20, %17 : vector<128x256xf32>
    %22 = arith.select %19, %17, %21 : vector<128x256xi1>, vector<128x256xf32>
    %23 = arith.truncf %22 : vector<128x256xf32> to vector<128x256xbf16>
    %c0_15 = arith.constant 0 : index
    %c0_16 = arith.constant 0 : index
    %24 = vector.load %arg7[%c0_15, %c0_16] : memref<256x128xbf16, #tpu.memory_space<vmem>>, vector<256x128xbf16>
    %cst_17 = arith.constant dense<0.000000e+00> : vector<128x128xf32>
    %25 = tpu.matmul %23, %24, %cst_17 {dimension_numbers = #tpu.dot_dimension_numbers<[1], [0], [0], [1], [0, 0, 1, 1], [], []>} : vector<128x256xbf16>, vector<256x128xbf16>, vector<128x128xf32> -> vector<128x128xf32>
    %c0_18 = arith.constant 0 : index
    %c0_19 = arith.constant 0 : index
    %26 = vector.load %arg8[%c0_18, %c0_19] : memref<1x128xf32, #tpu.memory_space<vmem>>, vector<1x128xf32>
    %27 = vector.broadcast %26 : vector<1x128xf32> to vector<128x128xf32>
    %28 = arith.addf %25, %27 : vector<128x128xf32>
    %29 = arith.mulf %28, %28 : vector<128x128xf32>
    %cst_20 = arith.constant dense<0.000000e+00> : vector<128xf32>
    %30 = vector.multi_reduction <add>, %29, %cst_20 [1] : vector<128x128xf32> to vector<128xf32>
    %31 = vector.shape_cast %30 : vector<128xf32> to vector<128x1xf32>
    %cst_21 = arith.constant 1.000000e-16 : f32
    %32 = vector.broadcast %cst_21 : f32 to vector<128x1xf32>
    %33 = arith.maximumf %31, %32 : vector<128x1xf32>
    %34 = math.rsqrt %33 : vector<128x1xf32>
    %35 = vector.broadcast %34 : vector<128x1xf32> to vector<128x128xf32>
    %36 = arith.mulf %28, %35 : vector<128x128xf32>
    %c0_i32 = arith.constant 0 : i32
    %37 = arith.cmpi eq, %arg1, %c0_i32 : i32
    %38 = arith.extui %37 : i1 to i32
    %c0_i32_22 = arith.constant 0 : i32
    %39 = arith.cmpi ne, %38, %c0_i32_22 : i32
    scf.if %39 {
      %cst_28 = arith.constant 0.000000e+00 : f32
      %46 = vector.broadcast %cst_28 : f32 to vector<128x128xf32>
      %c0_29 = arith.constant 0 : index
      %c0_30 = arith.constant 0 : index
      %47 = vector.load %arg10[%c0_29, %c0_30] : memref<128x128xf32, #tpu.memory_space<vmem>>, vector<128x128xf32>
      tpu.vector_store %arg10[%c0_29, %c0_30], %46 {strides = array<i32>} : memref<128x128xf32, #tpu.memory_space<vmem>>, vector<128x128xf32>,
    } else {
    }
    %c0_23 = arith.constant 0 : index
    %c0_24 = arith.constant 0 : index
    %40 = vector.load %arg10[%c0_23, %c0_24] : memref<128x128xf32, #tpu.memory_space<vmem>>, vector<128x128xf32>
    %41 = arith.addf %40, %36 : vector<128x128xf32>
    %c0_25 = arith.constant 0 : index
    %c0_26 = arith.constant 0 : index
    %42 = vector.load %arg10[%c0_25, %c0_26] : memref<128x128xf32, #tpu.memory_space<vmem>>, vector<128x128xf32>
    tpu.vector_store %arg10[%c0_25, %c0_26], %41 {strides = array<i32>} : memref<128x128xf32, #tpu.memory_space<vmem>>, vector<128x128xf32>,
    %c1_i32 = arith.constant 1 : i32
    %43 = arith.cmpi eq, %arg1, %c1_i32 : i32
    %44 = arith.extui %43 : i1 to i32
    %c0_i32_27 = arith.constant 0 : i32
    %45 = arith.cmpi ne, %44, %c0_i32_27 : i32
    scf.if %45 {
      %c0_28 = arith.constant 0 : index
      %c0_29 = arith.constant 0 : index
      %46 = vector.load %arg10[%c0_28, %c0_29] : memref<128x128xf32, #tpu.memory_space<vmem>>, vector<128x128xf32>
      %47 = arith.mulf %46, %46 : vector<128x128xf32>
      %cst_30 = arith.constant dense<0.000000e+00> : vector<128xf32>
      %48 = vector.multi_reduction <add>, %47, %cst_30 [1] : vector<128x128xf32> to vector<128xf32>
      %49 = vector.shape_cast %48 : vector<128xf32> to vector<128x1xf32>
      %cst_31 = arith.constant 1.000000e-16 : f32
      %50 = vector.broadcast %cst_31 : f32 to vector<128x1xf32>
      %51 = arith.maximumf %49, %50 : vector<128x1xf32>
      %52 = math.rsqrt %51 : vector<128x1xf32>
      %53 = vector.broadcast %52 : vector<128x1xf32> to vector<128x128xf32>
      %54 = arith.mulf %46, %53 : vector<128x128xf32>
      %c0_32 = arith.constant 0 : index
      %c0_33 = arith.constant 0 : index
      %55 = vector.load %arg9[%c0_32, %c0_33] : memref<128x128xf32, #tpu.memory_space<vmem>>, vector<128x128xf32>
      tpu.vector_store %arg9[%c0_32, %c0_33], %54 {strides = array<i32>} : memref<128x128xf32, #tpu.memory_space<vmem>>, vector<128x128xf32>,
    } else {
    }
    return
  }
  func.func @transform_0(%arg0: i32, %arg1: i32) -> (i32, i32, i32) {
    %c0_i32 = arith.constant 0 : i32
    %c0_i32_0 = arith.constant 0 : i32
    return %arg1, %arg0, %c0_i32 : i32, i32, i32
  }
  func.func @transform_1(%arg0: i32, %arg1: i32) -> (i32, i32) {
    %c0_i32 = arith.constant 0 : i32
    %c0_i32_0 = arith.constant 0 : i32
    %c0_i32_1 = arith.constant 0 : i32
    return %c0_i32, %c0_i32_0 : i32, i32
  }
  func.func @transform_2(%arg0: i32, %arg1: i32) -> (i32, i32) {
    %c0_i32 = arith.constant 0 : i32
    %c0_i32_0 = arith.constant 0 : i32
    %c0_i32_1 = arith.constant 0 : i32
    return %c0_i32, %c0_i32_0 : i32, i32
  }
  func.func @transform_3(%arg0: i32, %arg1: i32) -> (i32, i32) {
    %c0_i32 = arith.constant 0 : i32
    %c0_i32_0 = arith.constant 0 : i32
    %c0_i32_1 = arith.constant 0 : i32
    return %c0_i32, %c0_i32_0 : i32, i32
  }
  func.func @transform_4(%arg0: i32, %arg1: i32) -> (i32, i32) {
    %c0_i32 = arith.constant 0 : i32
    %c0_i32_0 = arith.constant 0 : i32
    %c0_i32_1 = arith.constant 0 : i32
    return %c0_i32, %c0_i32_0 : i32, i32
  }
  func.func @transform_5(%arg0: i32, %arg1: i32) -> (i32, i32) {
    %c0_i32 = arith.constant 0 : i32
    %c0_i32_0 = arith.constant 0 : i32
    %c0_i32_1 = arith.constant 0 : i32
    return %c0_i32, %c0_i32_0 : i32, i32
  }
  func.func @transform_6(%arg0: i32, %arg1: i32) -> (i32, i32) {
    %c0_i32 = arith.constant 0 : i32
    %c0_i32_0 = arith.constant 0 : i32
    %c0_i32_1 = arith.constant 0 : i32
    return %c0_i32, %c0_i32_0 : i32, i32
  }
  func.func @transform_7(%arg0: i32, %arg1: i32) -> (i32, i32) {
    %c0_i32 = arith.constant 0 : i32
    %c0_i32_0 = arith.constant 0 : i32
    return %arg0, %c0_i32 : i32, i32
  }
}

</mosaic_0001>

<llo_original>
// kernel: tpu_custom_call.1
$region0: #{tpu_custom_call.1}
  #allocation0 [shape = 'u32[]', space=smem, size = 0x4, offset = 0x4, fixed_abs, tag = 'smem constant byte address 0x4 - core index']
  #allocation1 [shape = 'u32[72,128]{1,0:T(1,128)}', space=vmem, size = 0x9000, scoped, tag = 'internal scratch']
  #allocation2 [shape = 'f32[128,128]{1,0:T(8,128)}', space=vmem, size = 0x10000, scoped, tag = 'scratch operand']
  %s0 = inlined_call_operand.hbm [shape: bf16[2,256,128], index: 0, kind: input, shape index: {}]
  %s1 = inlined_call_operand.hbm [shape: bf16[128,256], index: 1, kind: input, shape index: {}]
  %s2 = inlined_call_operand.hbm [shape: f32[1,256], index: 2, kind: input, shape index: {}]
  %s3 = inlined_call_operand.hbm [shape: bf16[256,256], index: 3, kind: input, shape index: {}]
  %s4 = inlined_call_operand.vmem [shape: f32[1,256], index: 4, kind: input, shape index: {}]
  %s5 = inlined_call_operand.hbm [shape: bf16[256,128], index: 5, kind: input, shape index: {}]
  %s6 = inlined_call_operand.vmem [shape: f32[1,128], index: 6, kind: input, shape index: {}]
  %s7 = inlined_call_operand.hbm [shape: f32[256,128], index: 7, kind: output, shape index: {}]
  %s8 = sld [smem:[#allocation0]]
  $region89: #{tpu_custom_call.1} parent=0
    _
  %s10 = ssub.s32 1, %s8
  %s11 = scalar_select 0, %s10, %s8
  $region1: #{tpu_custom_call.1} parent=0
    #allocation3 [shape = 'u8[65536]{0}', space=vmem, size = 0x10000, scoped, tag = 'input window, operand 0']
    #allocation4 [shape = 's32[2]{0}', space=sflag, size = 0x8, scoped, tag = 'scoped memory for tpu_custom_call.1']
    #allocation5 [shape = 's32[2]{0}', space=sflag, size = 0x8, scoped, tag = 'scoped memory for tpu_custom_call.1']
    #allocation6 [shape = 'u8[65536]{0}', space=vmem, size = 0x10000, scoped, tag = 'input window, operand 1, single buffered']
    #allocation7 [shape = 's32[1]{0}', space=sflag, size = 0x4, scoped, tag = 'scoped memory for tpu_custom_call.1']
    #allocation8 [shape = 'u8[1024]{0}', space=vmem, size = 0x400, scoped, tag = 'input window, operand 2, single buffered']
    #allocation9 [shape = 'u8[131072]{0}', space=vmem, size = 0x20000, scoped, tag = 'input window, operand 3, single buffered']
    #allocation10 [shape = 's32[1]{0}', space=sflag, size = 0x4, scoped, tag = 'scoped memory for tpu_custom_call.1']
    #allocation11 [shape = 'u8[65536]{0}', space=vmem, size = 0x10000, scoped, tag = 'input window, operand 5, single buffered']
    #allocation12 [shape = 'u8[131072]{0}', space=vmem, size = 0x20000, scoped, tag = 'output window, operand 0']
    %12 = vsyncpa [#allocation4], 0
    %s13 = scalar_lea.sflag [#allocation4], 1
    %14 = vsyncpa %s13, 0
    %15 = vsyncpa [#allocation7], 0
    %16 = vsyncpa [#allocation10], 0
    %17 = vsyncpa [#allocation5], 0
    %s18 = scalar_lea.sflag [#allocation5], 1
    %19 = vsyncpa %s18, 0
    loop: start=0, step=1, limit=6
    $region2: #{tpu_custom_call.1} parent=1 // loop_pre_header
      _
    $region3: #{tpu_custom_call.1} parent=1 // loop_header
      %s21 = sphi 0, %s25
      %p22 = scmp.ge.s32.totalorder %s21, 6
      %s28 = sphi 0, %s40
      %s29 = sphi 0, %s36
      %s30 = sphi 0, %s28
      %s31 = sphi 0, %s29
      %s32 = sphi 0, %s30
      %s33 = sphi 0, %s31
      %s45 = sphi 0, %s47
      %s48 = sphi 0, %s45
      %s49 = sphi 0, %s48
      %s65 = sphi 0, %s49
      %s69 = sphi 0, %s69
      %s71 = sphi 0, %s69
      %s72 = sphi 0, %s71
      %s86 = sphi 0, %s72
      %s90 = sphi 0, %s90
      %s92 = sphi 0, %s90
      %s93 = sphi 0, %s92
      %s107 = sphi 0, %s93
      %s111 = sphi 0, %s111
      %s113 = sphi 0, %s111
      %s114 = sphi 0, %s113
      %s128 = sphi 0, %s114
      %s132 = sphi 0, %s132
      %s134 = sphi 0, %s132
      %s135 = sphi 0, %s134
      %s149 = sphi 0, %s135
      %s153 = sphi 0, %s153
      %s155 = sphi 0, %s153
      %s156 = sphi 0, %s155
      %s170 = sphi 0, %s156
      %s174 = sphi 0, %s174
      %s176 = sphi 0, %s174
      %s177 = sphi 0, %s176
      %s191 = sphi 0, %s177
      %s197 = sphi 0, %s199
      %s200 = sphi 0, %s197
      %s201 = sphi 0, %s200
      %s217 = sphi 0, %s201
    $region4: #{tpu_custom_call.1} parent=1 // loop_header_branch
      %24 = sbr.rel (%p22) target = $region8
    $region5: #{tpu_custom_call.1} parent=1 // loop_body
      %s26 = ssub.s32 %s21, 1
      %s27 = ssub.s32 %s21, 2
      %s34 = sadd.s32 1, %s29
      %p35 = scmp.ge.s32.totalorder %s34, 2
      %s36 = scalar_select %p35, 0, %s34
      %s37 = sadd.s32 1, %s28
      %s38 = scalar_select %p35, %s37, %s28
      %p39 = scmp.ge.s32.totalorder %s38, 2
      %s40 = scalar_select %p39, 0, %s38
      %s41 = ssub.s32 %s29, %s36
      %s42 = ssub.s32 %s28, %s40
      %s43 = sor.u32 %s41, %s42
      %p44 = scmp.eq.s32.totalorder %s43, 0
      %s46 = sadd.s32 %s45, 1
      %s47 = scalar_select %p44, %s45, %s46
      %p50 = pneg %p44
      %p51 = scmp.eq.s32.totalorder %s21, 3
      %p52 = por %p50, %p51
      %p53 = scmp.ne.s32.totalorder %s45, %s48
      %p54 = scmp.eq.s32.totalorder %s21, 0
      %p55 = por %p53, %p54
      %p56 = scmp.ne.s32.totalorder %s45, %s48
      %p57 = scmp.eq.s32.totalorder %s26, 3
      %p58 = por %p56, %p57
      %p59 = scmp.ne.s32.totalorder %s48, %s49
      %p60 = scmp.eq.s32.totalorder %s26, 0
      %p61 = por %p59, %p60
      %p62 = scmp.ne.s32.totalorder %s48, %s49
      %p63 = scmp.eq.s32.totalorder %s27, 3
      %p64 = por %p62, %p63
      %p66 = scmp.ne.s32.totalorder %s49, %s65
      %p67 = scmp.eq.s32.totalorder %s27, 0
      %p68 = por %p66, %p67
      %s70 = sadd.s32 %s69, 1
      %p73 = scmp.eq.s32.totalorder %s21, 3
      %p74 = scmp.ne.s32.totalorder %s69, %s71
      %p75 = scmp.eq.s32.totalorder %s21, 0
      %p76 = por %p74, %p75
      %p77 = scmp.ne.s32.totalorder %s69, %s71
      %p78 = scmp.eq.s32.totalorder %s26, 3
      %p79 = por %p77, %p78
      %p80 = scmp.ne.s32.totalorder %s71, %s72
      %p81 = scmp.eq.s32.totalorder %s26, 0
      %p82 = por %p80, %p81
      %p83 = scmp.ne.s32.totalorder %s71, %s72
      %p84 = scmp.eq.s32.totalorder %s27, 3
      %p85 = por %p83, %p84
      %p87 = scmp.ne.s32.totalorder %s72, %s86
      %p88 = scmp.eq.s32.totalorder %s27, 0
      %p89 = por %p87, %p88
      %s91 = sadd.s32 %s90, 1
      %p94 = scmp.eq.s32.totalorder %s21, 3
      %p95 = scmp.ne.s32.totalorder %s90, %s92
      %p96 = scmp.eq.s32.totalorder %s21, 0
      %p97 = por %p95, %p96
      %p98 = scmp.ne.s32.totalorder %s90, %s92
      %p99 = scmp.eq.s32.totalorder %s26, 3
      %p100 = por %p98, %p99
      %p101 = scmp.ne.s32.totalorder %s92, %s93
      %p102 = scmp.eq.s32.totalorder %s26, 0
      %p103 = por %p101, %p102
      %p104 = scmp.ne.s32.totalorder %s92, %s93
      %p105 = scmp.eq.s32.totalorder %s27, 3
      %p106 = por %p104, %p105
      %p108 = scmp.ne.s32.totalorder %s93, %s107
      %p109 = scmp.eq.s32.totalorder %s27, 0
      %p110 = por %p108, %p109
      %s112 = sadd.s32 %s111, 1
      %p115 = scmp.eq.s32.totalorder %s21, 3
      %p116 = scmp.ne.s32.totalorder %s111, %s113
      %p117 = scmp.eq.s32.totalorder %s21, 0
      %p118 = por %p116, %p117
      %p119 = scmp.ne.s32.totalorder %s111, %s113
      %p120 = scmp.eq.s32.totalorder %s26, 3
      %p121 = por %p119, %p120
      %p122 = scmp.ne.s32.totalorder %s113, %s114
      %p123 = scmp.eq.s32.totalorder %s26, 0
      %p124 = por %p122, %p123
      %p125 = scmp.ne.s32.totalorder %s113, %s114
      %p126 = scmp.eq.s32.totalorder %s27, 3
      %p127 = por %p125, %p126
      %p129 = scmp.ne.s32.totalorder %s114, %s128
      %p130 = scmp.eq.s32.totalorder %s27, 0
      %p131 = por %p129, %p130
      %s133 = sadd.s32 %s132, 1
      %p136 = scmp.eq.s32.totalorder %s21, 3
      %p137 = scmp.ne.s32.totalorder %s132, %s134
      %p138 = scmp.eq.s32.totalorder %s21, 0
      %p139 = por %p137, %p138
      %p140 = scmp.ne.s32.totalorder %s132, %s134
      %p141 = scmp.eq.s32.totalorder %s26, 3
      %p142 = por %p140, %p141
      %p143 = scmp.ne.s32.totalorder %s134, %s135
      %p144 = scmp.eq.s32.totalorder %s26, 0
      %p145 = por %p143, %p144
      %p146 = scmp.ne.s32.totalorder %s134, %s135
      %p147 = scmp.eq.s32.totalorder %s27, 3
      %p148 = por %p146, %p147
      %p150 = scmp.ne.s32.totalorder %s135, %s149
      %p151 = scmp.eq.s32.totalorder %s27, 0
      %p152 = por %p150, %p151
      %s154 = sadd.s32 %s153, 1
      %p157 = scmp.eq.s32.totalorder %s21, 3
      %p158 = scmp.ne.s32.totalorder %s153, %s155
      %p159 = scmp.eq.s32.totalorder %s21, 0
      %p160 = por %p158, %p159
      %p161 = scmp.ne.s32.totalorder %s153, %s155
      %p162 = scmp.eq.s32.totalorder %s26, 3
      %p163 = por %p161, %p162
      %p164 = scmp.ne.s32.totalorder %s155, %s156
      %p165 = scmp.eq.s32.totalorder %s26, 0
      %p166 = por %p164, %p165
      %p167 = scmp.ne.s32.totalorder %s155, %s156
      %p168 = scmp.eq.s32.totalorder %s27, 3
      %p169 = por %p167, %p168
      %p171 = scmp.ne.s32.totalorder %s156, %s170
      %p172 = scmp.eq.s32.totalorder %s27, 0
      %p173 = por %p171, %p172
      %s175 = sadd.s32 %s174, 1
      %p178 = scmp.eq.s32.totalorder %s21, 3
      %p179 = scmp.ne.s32.totalorder %s174, %s176
      %p180 = scmp.eq.s32.totalorder %s21, 0
      %p181 = por %p179, %p180
      %p182 = scmp.ne.s32.totalorder %s174, %s176
      %p183 = scmp.eq.s32.totalorder %s26, 3
      %p184 = por %p182, %p183
      %p185 = scmp.ne.s32.totalorder %s176, %s177
      %p186 = scmp.eq.s32.totalorder %s26, 0
      %p187 = por %p185, %p186
      %p188 = scmp.ne.s32.totalorder %s176, %s177
      %p189 = scmp.eq.s32.totalorder %s27, 3
      %p190 = por %p188, %p189
      %p192 = scmp.ne.s32.totalorder %s177, %s191
      %p193 = scmp.eq.s32.totalorder %s27, 0
      %p194 = por %p192, %p193
      %s195 = ssub.s32 %s28, %s40
      %p196 = scmp.eq.s32.totalorder %s195, 0
      %s198 = sadd.s32 %s197, 1
      %s199 = scalar_select %p196, %s197, %s198
      %p202 = pneg %p196
      %p203 = scmp.eq.s32.totalorder %s21, 3
      %p204 = por %p202, %p203
      %p205 = scmp.ne.s32.totalorder %s197, %s200
      %p206 = scmp.eq.s32.totalorder %s21, 0
      %p207 = por %p205, %p206
      %p208 = scmp.ne.s32.totalorder %s197, %s200
      %p209 = scmp.eq.s32.totalorder %s26, 3
      %p210 = por %p208, %p209
      %p211 = scmp.ne.s32.totalorder %s200, %s201
      %p212 = scmp.eq.s32.totalorder %s26, 0
      %p213 = por %p211, %p212
      %p214 = scmp.ne.s32.totalorder %s200, %s201
      %p215 = scmp.eq.s32.totalorder %s27, 3
      %p216 = por %p214, %p215
      %p218 = scmp.ne.s32.totalorder %s201, %s217
      %p219 = scmp.eq.s32.totalorder %s27, 0
      %p220 = por %p218, %p219
      %p221 = scmp.le.s32.totalorder 1, %s21
      %p222 = scmp.lt.s32.totalorder %s21, 5
      %p223 = pnand %p221, %p222
      %p224 = pneg %p223
      // Predicated region
      $region9: #{tpu_custom_call.1} parent=5 // pred_check
        _
      $region10: #{tpu_custom_call.1} parent=5 // pred_check_branch
        %226 = sbr.rel (%p223) target = $region12
      $region11: #{tpu_custom_call.1} parent=5 // pred_region
        %s227 = ssub.s32 %s21, 1
        // Predicated region
        $region13: #{tpu_custom_call.1} parent=11 // pred_check
          %p228 = pneg %p82
        $region14: #{tpu_custom_call.1} parent=11 // pred_check_branch
          %230 = sbr.rel (%p228) target = $region16
        $region15: #{tpu_custom_call.1} parent=11 // pred_region
          %232 = vsyncadd [#allocation7], 0
          %s233 = sshll.u32 %s1, 4
          %s234 = int_to_ptr.hbm [resolvable:$true] %s233
          %s235 = sshll.u32 [#allocation6], 4
          %s236 = int_to_ptr.vmem [resolvable:$true] %s235
          %241 = dma.hbm_to_vmem [thread:$0]  %s234, 2048, %s236, [#allocation7], 128, 128, 8
        $region16: #{tpu_custom_call.1} parent=11 // pred_fallthru
          _
        // Predicated region
        $region17: #{tpu_custom_call.1} parent=11 // pred_check
          %p242 = pneg %p103
        $region18: #{tpu_custom_call.1} parent=11 // pred_check_branch
          %244 = sbr.rel (%p242) target = $region20
        $region19: #{tpu_custom_call.1} parent=11 // pred_region
          %246 = vsyncadd [#allocation7], 0
          %s248 = sshll.u32 %s2, 4
          %s249 = int_to_ptr.hbm [resolvable:$true] %s248
          %s250 = sshll.u32 [#allocation8], 4
          %s251 = int_to_ptr.vmem [resolvable:$true] %s250
          %253 = dma.hbm_to_vmem [thread:$0]  %s249, 32, %s251, [#allocation7]
        $region20: #{tpu_custom_call.1} parent=11 // pred_fallthru
          _
        // Predicated region
        $region21: #{tpu_custom_call.1} parent=11 // pred_check
          %p254 = pneg %p124
        $region22: #{tpu_custom_call.1} parent=11 // pred_check_branch
          %256 = sbr.rel (%p254) target = $region24
        $region23: #{tpu_custom_call.1} parent=11 // pred_region
          %258 = vsyncadd [#allocation10], 0
          %s259 = sshll.u32 %s3, 4
          %s260 = int_to_ptr.hbm [resolvable:$true] %s259
          %s261 = sshll.u32 [#allocation9], 4
          %s262 = int_to_ptr.vmem [resolvable:$true] %s261
          %267 = dma.hbm_to_vmem [thread:$0]  %s260, 4096, %s262, [#allocation10], 128, 128, 8
        $region24: #{tpu_custom_call.1} parent=11 // pred_fallthru
          _
        // Predicated region
        $region25: #{tpu_custom_call.1} parent=11 // pred_check
          %p268 = pneg %p145
        $region26: #{tpu_custom_call.1} parent=11 // pred_check_branch
          %270 = sbr.rel (%p268) target = $region28
        $region27: #{tpu_custom_call.1} parent=11 // pred_region
          _
        $region28: #{tpu_custom_call.1} parent=11 // pred_fallthru
          _
        // Predicated region
        $region29: #{tpu_custom_call.1} parent=11 // pred_check
          %p271 = pneg %p166
        $region30: #{tpu_custom_call.1} parent=11 // pred_check_branch
          %273 = sbr.rel (%p271) target = $region32
        $region31: #{tpu_custom_call.1} parent=11 // pred_region
          %275 = vsyncadd [#allocation10], 0
          %s276 = sshll.u32 %s5, 4
          %s277 = int_to_ptr.hbm [resolvable:$true] %s276
          %s278 = sshll.u32 [#allocation11], 4
          %s279 = int_to_ptr.vmem [resolvable:$true] %s278
          %284 = dma.hbm_to_vmem [thread:$0]  %s277, 2048, %s279, [#allocation10], 64, 64, 4
        $region32: #{tpu_custom_call.1} parent=11 // pred_fallthru
          _
        // Predicated region
        $region33: #{tpu_custom_call.1} parent=11 // pred_check
          %p285 = pneg %p187
        $region34: #{tpu_custom_call.1} parent=11 // pred_check_branch
          %287 = sbr.rel (%p285) target = $region36
        $region35: #{tpu_custom_call.1} parent=11 // pred_region
          _
        $region36: #{tpu_custom_call.1} parent=11 // pred_fallthru
          _
      $region12: #{tpu_custom_call.1} parent=5 // pred_fallthru
        _
      %p288 = scmp.lt.s32.totalorder %s21, 4
      // Predicated region
      $region37: #{tpu_custom_call.1} parent=5 // pred_check
        %p289 = pneg %p288
      $region38: #{tpu_custom_call.1} parent=5 // pred_check_branch
        %291 = sbr.rel (%p289) target = $region40
      $region39: #{tpu_custom_call.1} parent=5 // pred_region
        // Predicated region
        $region41: #{tpu_custom_call.1} parent=39 // pred_check
          %p292 = pneg %p55
        $region42: #{tpu_custom_call.1} parent=39 // pred_check_branch
          %294 = sbr.rel (%p292) target = $region44
        $region43: #{tpu_custom_call.1} parent=39 // pred_region
          %s295 = sand.u32 %s45, 1
          %s296 = scalar_lea.sflag [#allocation4], %s295
          %s297 = sand.u32 %s45, 1
          %s298 = smul.addr %s297, 64
          %s299 = scalar_lea.vmem [#allocation3], %s298
          %s300 = smul.u32 16, %s28
          %302 = vsyncadd %s296, 0
          %s303 = smul.addr %s29, 32
          %s304 = sadd.s32 %s300, %s303
          %s305 = smul.addr %s304, 4
          %s306 = scalar_lea.hbm %s0, %s305
          %s307 = sshll.u32 %s306, 4
          %s308 = int_to_ptr.hbm [resolvable:$true] %s307
          %s309 = sshll.u32 %s299, 4
          %s310 = int_to_ptr.vmem [resolvable:$true] %s309
          %315 = dma.hbm_to_vmem [thread:$0]  %s308, 1024, %s310, %s296, 64, 64, 4
        $region44: #{tpu_custom_call.1} parent=39 // pred_fallthru
          _
      $region40: #{tpu_custom_call.1} parent=5 // pred_fallthru
        _
      %p316 = scmp.le.s32.totalorder 1, %s21
      %p317 = scmp.lt.s32.totalorder %s21, 5
      %p318 = pnand %p316, %p317
      %p319 = pneg %p318
      // Predicated region
      $region45: #{tpu_custom_call.1} parent=5 // pred_check
        _
      $region46: #{tpu_custom_call.1} parent=5 // pred_check_branch
        %321 = sbr.rel (%p318) target = $region48
      $region47: #{tpu_custom_call.1} parent=5 // pred_region
        %s322 = ssub.s32 %s21, 1
        %s323 = sand.u32 %s48, 1
        %s324 = scalar_lea.sflag [#allocation4], %s323
        %s325 = sand.u32 %s48, 1
        %s326 = smul.addr %s325, 64
        %s327 = scalar_lea.vmem [#allocation3], %s326
        // Predicated region
        $region49: #{tpu_custom_call.1} parent=47 // pred_check
          %p328 = pneg %p61
        $region50: #{tpu_custom_call.1} parent=47 // pred_check_branch
          %330 = sbr.rel (%p328) target = $region52
        $region51: #{tpu_custom_call.1} parent=47 // pred_region
          %332 = dma.done %s324, 1024
        $region52: #{tpu_custom_call.1} parent=47 // pred_fallthru
          _
        // Predicated region
        $region53: #{tpu_custom_call.1} parent=47 // pred_check
          %p333 = pneg %p82
        $region54: #{tpu_custom_call.1} parent=47 // pred_check_branch
          %335 = sbr.rel (%p333) target = $region56
        $region55: #{tpu_custom_call.1} parent=47 // pred_region
          %337 = dma.done [#allocation7], 2048
        $region56: #{tpu_custom_call.1} parent=47 // pred_fallthru
          _
        // Predicated region
        $region57: #{tpu_custom_call.1} parent=47 // pred_check
          %p338 = pneg %p103
        $region58: #{tpu_custom_call.1} parent=47 // pred_check_branch
          %340 = sbr.rel (%p338) target = $region60
        $region59: #{tpu_custom_call.1} parent=47 // pred_region
          %342 = dma.done [#allocation7], 32
        $region60: #{tpu_custom_call.1} parent=47 // pred_fallthru
          _
        // Predicated region
        $region61: #{tpu_custom_call.1} parent=47 // pred_check
          %p343 = pneg %p124
        $region62: #{tpu_custom_call.1} parent=47 // pred_check_branch
          %345 = sbr.rel (%p343) target = $region64
        $region63: #{tpu_custom_call.1} parent=47 // pred_region
          %347 = dma.done [#allocation10], 4096
        $region64: #{tpu_custom_call.1} parent=47 // pred_fallthru
          _
        // Predicated region
        $region65: #{tpu_custom_call.1} parent=47 // pred_check
          %p348 = pneg %p166
        $region66: #{tpu_custom_call.1} parent=47 // pred_check_branch
          %350 = sbr.rel (%p348) target = $region68
        $region67: #{tpu_custom_call.1} parent=47 // pred_region
          %352 = dma.done [#allocation10], 2048
        $region68: #{tpu_custom_call.1} parent=47 // pred_fallthru
          _
        %s353 = sand.u32 %s48, 1
        %s354 = scalar_lea.sflag [#allocation4], %s353
        %s355 = sand.u32 %s48, 1
        %s356 = smul.addr %s355, 64
        %s357 = scalar_lea.vmem [#allocation3], %s356
        %p358 = pneg %p61
        %p359 = pneg %p58
        %p360 = pneg %p82
        %p361 = pneg %p79
        %p362 = pneg %p103
        %p363 = pneg %p100
        %p364 = pneg %p124
        %p365 = pneg %p121
        %p366 = pneg %p145
        %p367 = pneg %p142
        %p368 = pneg %p166
        %p369 = pneg %p163
        %p370 = pneg %p187
        %p371 = pneg %p184
        %p372 = pneg %p213
        %p373 = pneg %p210
        %s374 = sand.u32 %s200, 1
        %s375 = scalar_lea.sflag [#allocation5], %s374
        %s376 = sand.u32 %s200, 1
        %s377 = smul.addr %s376, 128
        %s378 = scalar_lea.vmem [#allocation12], %s377
        %s379 = smul.u32 16, %s30
        %s380 = smul.u32 16, %s30
        %v381 = vld [vmem:[%s327] sm:$0xf]
        %v382 = vld [vmem:[%s327 + $0x4] sm:$0xf]
        %v383 = vld [vmem:[%s327 + $0x8] sm:$0xf]
        %v384 = vld [vmem:[%s327 + $0xc] sm:$0xf]
        %v385 = vld [vmem:[%s327 + $0x10] sm:$0xf]
        %v386 = vld [vmem:[%s327 + $0x14] sm:$0xf]
        %v387 = vld [vmem:[%s327 + $0x18] sm:$0xf]
        %v388 = vld [vmem:[%s327 + $0x1c] sm:$0xf]
        %v389 = vld [vmem:[%s327 + $0x20] sm:$0xf]
        %v390 = vld [vmem:[%s327 + $0x24] sm:$0xf]
        %v391 = vld [vmem:[%s327 + $0x28] sm:$0xf]
        %v392 = vld [vmem:[%s327 + $0x2c] sm:$0xf]
        %v393 = vld [vmem:[%s327 + $0x30] sm:$0xf]
        %v394 = vld [vmem:[%s327 + $0x34] sm:$0xf]
        %v395 = vld [vmem:[%s327 + $0x38] sm:$0xf]
        %v396 = vld [vmem:[%s327 + $0x3c] sm:$0xf]
        %v397 = vld [vmem:[#allocation6] sm:$0xff]
        %v398 = vld [vmem:[#allocation6 + $0x8] sm:$0xff]
        %v399 = vld [vmem:[#allocation6 + $0x10] sm:$0xff]
        %v400 = vld [vmem:[#allocation6 + $0x18] sm:$0xff]
        %v401 = vld [vmem:[#allocation6 + $0x20] sm:$0xff]
        %v402 = vld [vmem:[#allocation6 + $0x28] sm:$0xff]
        %v403 = vld [vmem:[#allocation6 + $0x30] sm:$0xff]
        %v404 = vld [vmem:[#allocation6 + $0x38] sm:$0xff]
        %v405 = vld [vmem:[#allocation6 + $0x40] sm:$0xff]
        %v406 = vld [vmem:[#allocation6 + $0x48] sm:$0xff]
        %v407 = vld [vmem:[#allocation6 + $0x50] sm:$0xff]
        %v408 = vld [vmem:[#allocation6 + $0x58] sm:$0xff]
        %v409 = vld [vmem:[#allocation6 + $0x60] sm:$0xff]
        %v410 = vld [vmem:[#allocation6 + $0x68] sm:$0xff]
        %v411 = vld [vmem:[#allocation6 + $0x70] sm:$0xff]
        %v412 = vld [vmem:[#allocation6 + $0x78] sm:$0xff]
        %v413 = vld [vmem:[#allocation8] sm:$0x3]
        %v415 = vperm.slane %v413, 0
        %v416 = vperm.slane %v413, 1
        %v435 = vunpack.c.l.b16 %v381
        %v436 = vunpack.c.l.b16 %v382
        %v437 = vunpack.c.l.b16 %v383
        %v438 = vunpack.c.l.b16 %v384
        %v439 = vunpack.c.l.b16 %v385
        %v440 = vunpack.c.l.b16 %v386
        %v441 = vunpack.c.l.b16 %v387
        %v442 = vunpack.c.l.b16 %v388
        %v443 = vunpack.c.l.b16 %v389
        %v444 = vunpack.c.l.b16 %v390
        %v445 = vunpack.c.l.b16 %v391
        %v446 = vunpack.c.l.b16 %v392
        %v447 = vunpack.c.l.b16 %v393
        %v448 = vunpack.c.l.b16 %v394
        %v449 = vunpack.c.l.b16 %v395
        %v450 = vunpack.c.l.b16 %v396
        %v451 = vpack.c.b16 %v436, %v435
        %v452 = vpack.c.b16 %v438, %v437
        %v453 = vpack.c.b16 %v440, %v439
        %v454 = vpack.c.b16 %v442, %v441
        %v455 = vpack.c.b16 %v444, %v443
        %v456 = vpack.c.b16 %v446, %v445
        %v457 = vpack.c.b16 %v448, %v447
        %v458 = vpack.c.b16 %v450, %v449
        %v483 = vunpack.c.l.b16 %v397
        %v484 = vunpack.c.h.b16 %v397
        %v485 = vunpack.c.l.b16 %v398
        %v486 = vunpack.c.h.b16 %v398
        %v487 = vunpack.c.l.b16 %v399
        %v488 = vunpack.c.h.b16 %v399
        %v489 = vunpack.c.l.b16 %v400
        %v490 = vunpack.c.h.b16 %v400
        %v491 = vunpack.c.l.b16 %v401
        %v492 = vunpack.c.h.b16 %v401
        %v493 = vunpack.c.l.b16 %v402
        %v494 = vunpack.c.h.b16 %v402
        %v495 = vunpack.c.l.b16 %v403
        %v496 = vunpack.c.h.b16 %v403
        %v497 = vunpack.c.l.b16 %v404
        %v498 = vunpack.c.h.b16 %v404
        %v499 = vunpack.c.l.b16 %v405
        %v500 = vunpack.c.h.b16 %v405
        %v501 = vunpack.c.l.b16 %v406
        %v502 = vunpack.c.h.b16 %v406
        %v503 = vunpack.c.l.b16 %v407
        %v504 = vunpack.c.h.b16 %v407
        %v505 = vunpack.c.l.b16 %v408
        %v506 = vunpack.c.h.b16 %v408
        %v507 = vunpack.c.l.b16 %v409
        %v508 = vunpack.c.h.b16 %v409
        %v509 = vunpack.c.l.b16 %v410
        %v510 = vunpack.c.h.b16 %v410
        %v511 = vunpack.c.l.b16 %v411
        %v512 = vunpack.c.h.b16 %v411
        %v513 = vunpack.c.l.b16 %v412
        %v514 = vunpack.c.h.b16 %v412
        %v515 = vpack.c.b16 %v485, %v483
        %v516 = vpack.c.b16 %v486, %v484
        %v517 = vpack.c.b16 %v489, %v487
        %v518 = vpack.c.b16 %v490, %v488
        %v519 = vpack.c.b16 %v493, %v491
        %v520 = vpack.c.b16 %v494, %v492
        %v521 = vpack.c.b16 %v497, %v495
        %v522 = vpack.c.b16 %v498, %v496
        %v523 = vpack.c.b16 %v501, %v499
        %v524 = vpack.c.b16 %v502, %v500
        %v525 = vpack.c.b16 %v505, %v503
        %v526 = vpack.c.b16 %v506, %v504
        %v527 = vpack.c.b16 %v509, %v507
        %v528 = vpack.c.b16 %v510, %v508
        %v529 = vpack.c.b16 %v513, %v511
        %v530 = vpack.c.b16 %v514, %v512
        %547 = vmatpush.bf16.msra.mxu0 %v529
        %548 = vmatpush.bf16.msra.mxu0 %v527
        %549 = vmatpush.bf16.msra.mxu0 %v525
        %550 = vmatpush.bf16.msra.mxu0 %v523
        %551 = vmatpush.bf16.msra.mxu0 %v521
        %552 = vmatpush.bf16.msra.mxu0 %v519
        %553 = vmatpush.bf16.msra.mxu0 %v517
        %554 = vmatpush.bf16.msra.mxu0 %v515
        %555 = vmatmul.bf16.gmra.mxu0 %v451
        %v556 = vpop.f32.mrf.mxu0
        %v557 = vadd.f32 %v415, %v556
        %v558 = vpop.f32.mrf.mxu0
        %v559 = vadd.f32 %v415, %v558
        %560 = vmatmul.bf16.gmra.mxu0 %v452
        %v561 = vpop.f32.mrf.mxu0
        %v562 = vadd.f32 %v415, %v561
        %v563 = vpop.f32.mrf.mxu0
        %v564 = vadd.f32 %v415, %v563
        %565 = vmatmul.bf16.gmra.mxu0 %v453
        %v566 = vpop.f32.mrf.mxu0
        %v567 = vadd.f32 %v415, %v566
        %v568 = vpop.f32.mrf.mxu0
        %v569 = vadd.f32 %v415, %v568
        %570 = vmatmul.bf16.gmra.mxu0 %v454
        %v571 = vpop.f32.mrf.mxu0
        %v572 = vadd.f32 %v415, %v571
        %v573 = vpop.f32.mrf.mxu0
        %v574 = vadd.f32 %v415, %v573
        %575 = vmatmul.bf16.gmra.mxu0 %v455
        %v576 = vpop.f32.mrf.mxu0
        %v577 = vadd.f32 %v415, %v576
        %v578 = vpop.f32.mrf.mxu0
        %v579 = vadd.f32 %v415, %v578
        %580 = vmatmul.bf16.gmra.mxu0 %v456
        %v581 = vpop.f32.mrf.mxu0
        %v582 = vadd.f32 %v415, %v581
        %v583 = vpop.f32.mrf.mxu0
        %v584 = vadd.f32 %v415, %v583
        %585 = vmatmul.bf16.gmra.mxu0 %v457
        %v586 = vpop.f32.mrf.mxu0
        %v587 = vadd.f32 %v415, %v586
        %v588 = vpop.f32.mrf.mxu0
        %v589 = vadd.f32 %v415, %v588
        %590 = vmatmul.bf16.gmra.mxu0 %v458
        %v591 = vpop.f32.mrf.mxu0
        %v592 = vadd.f32 %v415, %v591
        %v593 = vpop.f32.mrf.mxu0
        %v594 = vadd.f32 %v415, %v593
        %595 = vdwg.mxu0
        %596 = vmatpush.bf16.msra.mxu0 %v530
        %597 = vmatpush.bf16.msra.mxu0 %v528
        %598 = vmatpush.bf16.msra.mxu0 %v526
        %599 = vmatpush.bf16.msra.mxu0 %v524
        %600 = vmatpush.bf16.msra.mxu0 %v522
        %601 = vmatpush.bf16.msra.mxu0 %v520
        %602 = vmatpush.bf16.msra.mxu0 %v518
        %603 = vmatpush.bf16.msra.mxu0 %v516
        %604 = vmatmul.bf16.gmra.mxu0 %v451
        %v605 = vpop.f32.mrf.mxu0
        %v606 = vadd.f32 %v416, %v605
        %v607 = vpop.f32.mrf.mxu0
        %v608 = vadd.f32 %v416, %v607
        %609 = vmatmul.bf16.gmra.mxu0 %v452
        %v610 = vpop.f32.mrf.mxu0
        %v611 = vadd.f32 %v416, %v610
        %v612 = vpop.f32.mrf.mxu0
        %v613 = vadd.f32 %v416, %v612
        %614 = vmatmul.bf16.gmra.mxu0 %v453
        %v615 = vpop.f32.mrf.mxu0
        %v616 = vadd.f32 %v416, %v615
        %v617 = vpop.f32.mrf.mxu0
        %v618 = vadd.f32 %v416, %v617
        %619 = vmatmul.bf16.gmra.mxu0 %v454
        %v620 = vpop.f32.mrf.mxu0
        %v621 = vadd.f32 %v416, %v620
        %v622 = vpop.f32.mrf.mxu0
        %v623 = vadd.f32 %v416, %v622
        %624 = vmatmul.bf16.gmra.mxu0 %v455
        %v625 = vpop.f32.mrf.mxu0
        %v626 = vadd.f32 %v416, %v625
        %v627 = vpop.f32.mrf.mxu0
        %v628 = vadd.f32 %v416, %v627
        %629 = vmatmul.bf16.gmra.mxu0 %v456
        %v630 = vpop.f32.mrf.mxu0
        %v631 = vadd.f32 %v416, %v630
        %v632 = vpop.f32.mrf.mxu0
        %v633 = vadd.f32 %v416, %v632
        %634 = vmatmul.bf16.gmra.mxu0 %v457
        %v635 = vpop.f32.mrf.mxu0
        %v636 = vadd.f32 %v416, %v635
        %v637 = vpop.f32.mrf.mxu0
        %v638 = vadd.f32 %v416, %v637
        %639 = vmatmul.bf16.gmra.mxu0 %v458
        %v640 = vpop.f32.mrf.mxu0
        %v641 = vadd.f32 %v416, %v640
        %v642 = vpop.f32.mrf.mxu0
        %v643 = vadd.f32 %v416, %v642
        %644 = vdwg.mxu0
        %vm645 = vcmp.ge.f32.partialorder %v557, 0.0
        %vm646 = vcmp.ge.f32.partialorder %v606, 0.0
        %vm647 = vcmp.ge.f32.partialorder %v559, 0.0
        %vm648 = vcmp.ge.f32.partialorder %v608, 0.0
        %vm649 = vcmp.ge.f32.partialorder %v562, 0.0
        %vm650 = vcmp.ge.f32.partialorder %v611, 0.0
        %vm651 = vcmp.ge.f32.partialorder %v564, 0.0
        %vm652 = vcmp.ge.f32.partialorder %v613, 0.0
        %vm653 = vcmp.ge.f32.partialorder %v567, 0.0
        %vm654 = vcmp.ge.f32.partialorder %v616, 0.0
        %vm655 = vcmp.ge.f32.partialorder %v569, 0.0
        %vm656 = vcmp.ge.f32.partialorder %v618, 0.0
        %vm657 = vcmp.ge.f32.partialorder %v572, 0.0
        %vm658 = vcmp.ge.f32.partialorder %v621, 0.0
        %vm659 = vcmp.ge.f32.partialorder %v574, 0.0
        %vm660 = vcmp.ge.f32.partialorder %v623, 0.0
        %vm661 = vcmp.ge.f32.partialorder %v577, 0.0
        %vm662 = vcmp.ge.f32.partialorder %v626, 0.0
        %vm663 = vcmp.ge.f32.partialorder %v579, 0.0
        %vm664 = vcmp.ge.f32.partialorder %v628, 0.0
        %vm665 = vcmp.ge.f32.partialorder %v582, 0.0
        %vm666 = vcmp.ge.f32.partialorder %v631, 0.0
        %vm667 = vcmp.ge.f32.partialorder %v584, 0.0
        %vm668 = vcmp.ge.f32.partialorder %v633, 0.0
        %vm669 = vcmp.ge.f32.partialorder %v587, 0.0
        %vm670 = vcmp.ge.f32.partialorder %v636, 0.0
        %vm671 = vcmp.ge.f32.partialorder %v589, 0.0
        %vm672 = vcmp.ge.f32.partialorder %v638, 0.0
        %vm673 = vcmp.ge.f32.partialorder %v592, 0.0
        %vm674 = vcmp.ge.f32.partialorder %v641, 0.0
        %vm675 = vcmp.ge.f32.partialorder %v594, 0.0
        %vm676 = vcmp.ge.f32.partialorder %v643, 0.0
        %v677 = vmul.f32 %v557, 0.01
        %v678 = vmul.f32 %v606, 0.01
        %v679 = vmul.f32 %v559, 0.01
        %v680 = vmul.f32 %v608, 0.01
        %v681 = vmul.f32 %v562, 0.01
        %v682 = vmul.f32 %v611, 0.01
        %v683 = vmul.f32 %v564, 0.01
        %v684 = vmul.f32 %v613, 0.01
        %v685 = vmul.f32 %v567, 0.01
        %v686 = vmul.f32 %v616, 0.01
        %v687 = vmul.f32 %v569, 0.01
        %v688 = vmul.f32 %v618, 0.01
        %v689 = vmul.f32 %v572, 0.01
        %v690 = vmul.f32 %v621, 0.01
        %v691 = vmul.f32 %v574, 0.01
        %v692 = vmul.f32 %v623, 0.01
        %v693 = vmul.f32 %v577, 0.01
        %v694 = vmul.f32 %v626, 0.01
        %v695 = vmul.f32 %v579, 0.01
        %v696 = vmul.f32 %v628, 0.01
        %v697 = vmul.f32 %v582, 0.01
        %v698 = vmul.f32 %v631, 0.01
        %v699 = vmul.f32 %v584, 0.01
        %v700 = vmul.f32 %v633, 0.01
        %v701 = vmul.f32 %v587, 0.01
        %v702 = vmul.f32 %v636, 0.01
        %v703 = vmul.f32 %v589, 0.01
        %v704 = vmul.f32 %v638, 0.01
        %v705 = vmul.f32 %v592, 0.01
        %v706 = vmul.f32 %v641, 0.01
        %v707 = vmul.f32 %v594, 0.01
        %v708 = vmul.f32 %v643, 0.01
        %v709 = vsel %vm645, %v557, %v677
        %v710 = vsel %vm646, %v606, %v678
        %v711 = vsel %vm647, %v559, %v679
        %v712 = vsel %vm648, %v608, %v680
        %v713 = vsel %vm649, %v562, %v681
        %v714 = vsel %vm650, %v611, %v682
        %v715 = vsel %vm651, %v564, %v683
        %v716 = vsel %vm652, %v613, %v684
        %v717 = vsel %vm653, %v567, %v685
        %v718 = vsel %vm654, %v616, %v686
        %v719 = vsel %vm655, %v569, %v687
        %v720 = vsel %vm656, %v618, %v688
        %v721 = vsel %vm657, %v572, %v689
        %v722 = vsel %vm658, %v621, %v690
        %v723 = vsel %vm659, %v574, %v691
        %v724 = vsel %vm660, %v623, %v692
        %v725 = vsel %vm661, %v577, %v693
        %v726 = vsel %vm662, %v626, %v694
        %v727 = vsel %vm663, %v579, %v695
        %v728 = vsel %vm664, %v628, %v696
        %v729 = vsel %vm665, %v582, %v697
        %v730 = vsel %vm666, %v631, %v698
        %v731 = vsel %vm667, %v584, %v699
        %v732 = vsel %vm668, %v633, %v700
        %v733 = vsel %vm669, %v587, %v701
        %v734 = vsel %vm670, %v636, %v702
        %v735 = vsel %vm671, %v589, %v703
        %v736 = vsel %vm672, %v638, %v704
        %v737 = vsel %vm673, %v592, %v705
        %v738 = vsel %vm674, %v641, %v706
        %v739 = vsel %vm675, %v594, %v707
        %v740 = vsel %vm676, %v643, %v708
        %v741 = vpack.c.bf16 %v711, %v709
        %v742 = vpack.c.bf16 %v712, %v710
        %v743 = vpack.c.bf16 %v715, %v713
        %v744 = vpack.c.bf16 %v716, %v714
        %v745 = vpack.c.bf16 %v719, %v717
        %v746 = vpack.c.bf16 %v720, %v718
        %v747 = vpack.c.bf16 %v723, %v721
        %v748 = vpack.c.bf16 %v724, %v722
        %v749 = vpack.c.bf16 %v727, %v725
        %v750 = vpack.c.bf16 %v728, %v726
        %v751 = vpack.c.bf16 %v731, %v729
        %v752 = vpack.c.bf16 %v732, %v730
        %v753 = vpack.c.bf16 %v735, %v733
        %v754 = vpack.c.bf16 %v736, %v734
        %v755 = vpack.c.bf16 %v739, %v737
        %v756 = vpack.c.bf16 %v740, %v738
        %v757 = vld [vmem:[#allocation9] sm:$0xff]
        %v758 = vld [vmem:[#allocation9 + $0x8] sm:$0xff]
        %v759 = vld [vmem:[#allocation9 + $0x10] sm:$0xff]
        %v760 = vld [vmem:[#allocation9 + $0x18] sm:$0xff]
        %v761 = vld [vmem:[#allocation9 + $0x20] sm:$0xff]
        %v762 = vld [vmem:[#allocation9 + $0x28] sm:$0xff]
        %v763 = vld [vmem:[#allocation9 + $0x30] sm:$0xff]
        %v764 = vld [vmem:[#allocation9 + $0x38] sm:$0xff]
        %v765 = vld [vmem:[#allocation9 + $0x40] sm:$0xff]
        %v766 = vld [vmem:[#allocation9 + $0x48] sm:$0xff]
        %v767 = vld [vmem:[#allocation9 + $0x50] sm:$0xff]
        %v768 = vld [vmem:[#allocation9 + $0x58] sm:$0xff]
        %v769 = vld [vmem:[#allocation9 + $0x60] sm:$0xff]
        %v770 = vld [vmem:[#allocation9 + $0x68] sm:$0xff]
        %v771 = vld [vmem:[#allocation9 + $0x70] sm:$0xff]
        %v772 = vld [vmem:[#allocation9 + $0x78] sm:$0xff]
        %v773 = vld [vmem:[#allocation9 + $0x80] sm:$0xff]
        %v774 = vld [vmem:[#allocation9 + $0x88] sm:$0xff]
        %v775 = vld [vmem:[#allocation9 + $0x90] sm:$0xff]
        %v776 = vld [vmem:[#allocation9 + $0x98] sm:$0xff]
        %v777 = vld [vmem:[#allocation9 + $0xa0] sm:$0xff]
        %v778 = vld [vmem:[#allocation9 + $0xa8] sm:$0xff]
        %v779 = vld [vmem:[#allocation9 + $0xb0] sm:$0xff]
        %v780 = vld [vmem:[#allocation9 + $0xb8] sm:$0xff]
        %v781 = vld [vmem:[#allocation9 + $0xc0] sm:$0xff]
        %v782 = vld [vmem:[#allocation9 + $0xc8] sm:$0xff]
        %v783 = vld [vmem:[#allocation9 + $0xd0] sm:$0xff]
        %v784 = vld [vmem:[#allocation9 + $0xd8] sm:$0xff]
        %v785 = vld [vmem:[#allocation9 + $0xe0] sm:$0xff]
        %v786 = vld [vmem:[#allocation9 + $0xe8] sm:$0xff]
        %v787 = vld [vmem:[#allocation9 + $0xf0] sm:$0xff]
        %v788 = vld [vmem:[#allocation9 + $0xf8] sm:$0xff]
        %v789 = vld [vmem:[%s4] sm:$0x3]
        %v791 = vperm.slane %v789, 0
        %v792 = vperm.slane %v789, 1
        %v827 = vunpack.c.l.b16 %v757
        %v828 = vunpack.c.h.b16 %v757
        %v829 = vunpack.c.l.b16 %v758
        %v830 = vunpack.c.h.b16 %v758
        %v831 = vunpack.c.l.b16 %v759
        %v832 = vunpack.c.h.b16 %v759
        %v833 = vunpack.c.l.b16 %v760
        %v834 = vunpack.c.h.b16 %v760
        %v835 = vunpack.c.l.b16 %v761
        %v836 = vunpack.c.h.b16 %v761
        %v837 = vunpack.c.l.b16 %v762
        %v838 = vunpack.c.h.b16 %v762
        %v839 = vunpack.c.l.b16 %v763
        %v840 = vunpack.c.h.b16 %v763
        %v841 = vunpack.c.l.b16 %v764
        %v842 = vunpack.c.h.b16 %v764
        %v843 = vunpack.c.l.b16 %v765
        %v844 = vunpack.c.h.b16 %v765
        %v845 = vunpack.c.l.b16 %v766
        %v846 = vunpack.c.h.b16 %v766
        %v847 = vunpack.c.l.b16 %v767
        %v848 = vunpack.c.h.b16 %v767
        %v849 = vunpack.c.l.b16 %v768
        %v850 = vunpack.c.h.b16 %v768
        %v851 = vunpack.c.l.b16 %v769
        %v852 = vunpack.c.h.b16 %v769
        %v853 = vunpack.c.l.b16 %v770
        %v854 = vunpack.c.h.b16 %v770
        %v855 = vunpack.c.l.b16 %v771
        %v856 = vunpack.c.h.b16 %v771
        %v857 = vunpack.c.l.b16 %v772
        %v858 = vunpack.c.h.b16 %v772
        %v859 = vunpack.c.l.b16 %v773
        %v860 = vunpack.c.h.b16 %v773
        %v861 = vunpack.c.l.b16 %v774
        %v862 = vunpack.c.h.b16 %v774
        %v863 = vunpack.c.l.b16 %v775
        %v864 = vunpack.c.h.b16 %v775
        %v865 = vunpack.c.l.b16 %v776
        %v866 = vunpack.c.h.b16 %v776
        %v867 = vunpack.c.l.b16 %v777
        %v868 = vunpack.c.h.b16 %v777
        %v869 = vunpack.c.l.b16 %v778
        %v870 = vunpack.c.h.b16 %v778
        %v871 = vunpack.c.l.b16 %v779
        %v872 = vunpack.c.h.b16 %v779
        %v873 = vunpack.c.l.b16 %v780
        %v874 = vunpack.c.h.b16 %v780
        %v875 = vunpack.c.l.b16 %v781
        %v876 = vunpack.c.h.b16 %v781
        %v877 = vunpack.c.l.b16 %v782
        %v878 = vunpack.c.h.b16 %v782
        %v879 = vunpack.c.l.b16 %v783
        %v880 = vunpack.c.h.b16 %v783
        %v881 = vunpack.c.l.b16 %v784
        %v882 = vunpack.c.h.b16 %v784
        %v883 = vunpack.c.l.b16 %v785
        %v884 = vunpack.c.h.b16 %v785
        %v885 = vunpack.c.l.b16 %v786
        %v886 = vunpack.c.h.b16 %v786
        %v887 = vunpack.c.l.b16 %v787
        %v888 = vunpack.c.h.b16 %v787
        %v889 = vunpack.c.l.b16 %v788
        %v890 = vunpack.c.h.b16 %v788
        %v891 = vpack.c.b16 %v829, %v827
        %v892 = vpack.c.b16 %v830, %v828
        %v893 = vpack.c.b16 %v833, %v831
        %v894 = vpack.c.b16 %v834, %v832
        %v895 = vpack.c.b16 %v837, %v835
        %v896 = vpack.c.b16 %v838, %v836
        %v897 = vpack.c.b16 %v841, %v839
        %v898 = vpack.c.b16 %v842, %v840
        %v899 = vpack.c.b16 %v845, %v843
        %v900 = vpack.c.b16 %v846, %v844
        %v901 = vpack.c.b16 %v849, %v847
        %v902 = vpack.c.b16 %v850, %v848
        %v903 = vpack.c.b16 %v853, %v851
        %v904 = vpack.c.b16 %v854, %v852
        %v905 = vpack.c.b16 %v857, %v855
        %v906 = vpack.c.b16 %v858, %v856
        %v907 = vpack.c.b16 %v861, %v859
        %v908 = vpack.c.b16 %v862, %v860
        %v909 = vpack.c.b16 %v865, %v863
        %v910 = vpack.c.b16 %v866, %v864
        %v911 = vpack.c.b16 %v869, %v867
        %v912 = vpack.c.b16 %v870, %v868
        %v913 = vpack.c.b16 %v873, %v871
        %v914 = vpack.c.b16 %v874, %v872
        %v915 = vpack.c.b16 %v877, %v875
        %v916 = vpack.c.b16 %v878, %v876
        %v917 = vpack.c.b16 %v881, %v879
        %v918 = vpack.c.b16 %v882, %v880
        %v919 = vpack.c.b16 %v885, %v883
        %v920 = vpack.c.b16 %v886, %v884
        %v921 = vpack.c.b16 %v889, %v887
        %v922 = vpack.c.b16 %v890, %v888
        %955 = vmatpush.bf16.msra.mxu0 %v905
        %956 = vmatpush.bf16.msra.mxu0 %v903
        %957 = vmatpush.bf16.msra.mxu0 %v901
        %958 = vmatpush.bf16.msra.mxu0 %v899
        %959 = vmatpush.bf16.msra.mxu0 %v897
        %960 = vmatpush.bf16.msra.mxu0 %v895
        %961 = vmatpush.bf16.msra.mxu0 %v893
        %962 = vmatpush.bf16.msra.mxu0 %v891
        %963 = vmatmul.bf16.gmra.mxu0 %v741
        %v964 = vpop.f32.mrf.mxu0
        %v965 = vadd.f32 %v791, %v964
        %v966 = vpop.f32.mrf.mxu0
        %v967 = vadd.f32 %v791, %v966
        %968 = vmatmul.bf16.gmra.mxu0 %v743
        %v969 = vpop.f32.mrf.mxu0
        %v970 = vadd.f32 %v791, %v969
        %v971 = vpop.f32.mrf.mxu0
        %v972 = vadd.f32 %v791, %v971
        %973 = vmatmul.bf16.gmra.mxu0 %v745
        %v974 = vpop.f32.mrf.mxu0
        %v975 = vadd.f32 %v791, %v974
        %v976 = vpop.f32.mrf.mxu0
        %v977 = vadd.f32 %v791, %v976
        %978 = vmatmul.bf16.gmra.mxu0 %v747
        %v979 = vpop.f32.mrf.mxu0
        %v980 = vadd.f32 %v791, %v979
        %v981 = vpop.f32.mrf.mxu0
        %v982 = vadd.f32 %v791, %v981
        %983 = vmatmul.bf16.gmra.mxu0 %v749
        %v984 = vpop.f32.mrf.mxu0
        %v985 = vadd.f32 %v791, %v984
        %v986 = vpop.f32.mrf.mxu0
        %v987 = vadd.f32 %v791, %v986
        %988 = vmatmul.bf16.gmra.mxu0 %v751
        %v989 = vpop.f32.mrf.mxu0
        %v990 = vadd.f32 %v791, %v989
        %v991 = vpop.f32.mrf.mxu0
        %v992 = vadd.f32 %v791, %v991
        %993 = vmatmul.bf16.gmra.mxu0 %v753
        %v994 = vpop.f32.mrf.mxu0
        %v995 = vadd.f32 %v791, %v994
        %v996 = vpop.f32.mrf.mxu0
        %v997 = vadd.f32 %v791, %v996
        %998 = vmatmul.bf16.gmra.mxu0 %v755
        %v999 = vpop.f32.mrf.mxu0
        %v1000 = vadd.f32 %v791, %v999
        %v1001 = vpop.f32.mrf.mxu0
        %v1002 = vadd.f32 %v791, %v1001
        %1003 = vdwg.mxu0
        %1004 = vmatpush.bf16.msra.mxu0 %v921
        %1005 = vmatpush.bf16.msra.mxu0 %v919
        %1006 = vmatpush.bf16.msra.mxu0 %v917
        %1007 = vmatpush.bf16.msra.mxu0 %v915
        %1008 = vmatpush.bf16.msra.mxu0 %v913
        %1009 = vmatpush.bf16.msra.mxu0 %v911
        %1010 = vmatpush.bf16.msra.mxu0 %v909
        %1011 = vmatpush.bf16.msra.mxu0 %v907
        %1012 = vmatmul.bf16.gmra.mxu0 %v742
        %v1013 = vpop.f32.mrf.mxu0
        %v1014 = vadd.f32 %v965, %v1013
        %v1015 = vpop.f32.mrf.mxu0
        %v1016 = vadd.f32 %v967, %v1015
        %1017 = vmatmul.bf16.gmra.mxu0 %v744
        %v1018 = vpop.f32.mrf.mxu0
        %v1019 = vadd.f32 %v970, %v1018
        %v1020 = vpop.f32.mrf.mxu0
        %v1021 = vadd.f32 %v972, %v1020
        %1022 = vmatmul.bf16.gmra.mxu0 %v746
        %v1023 = vpop.f32.mrf.mxu0
        %v1024 = vadd.f32 %v975, %v1023
        %v1025 = vpop.f32.mrf.mxu0
        %v1026 = vadd.f32 %v977, %v1025
        %1027 = vmatmul.bf16.gmra.mxu0 %v748
        %v1028 = vpop.f32.mrf.mxu0
        %v1029 = vadd.f32 %v980, %v1028
        %v1030 = vpop.f32.mrf.mxu0
        %v1031 = vadd.f32 %v982, %v1030
        %1032 = vmatmul.bf16.gmra.mxu0 %v750
        %v1033 = vpop.f32.mrf.mxu0
        %v1034 = vadd.f32 %v985, %v1033
        %v1035 = vpop.f32.mrf.mxu0
        %v1036 = vadd.f32 %v987, %v1035
        %1037 = vmatmul.bf16.gmra.mxu0 %v752
        %v1038 = vpop.f32.mrf.mxu0
        %v1039 = vadd.f32 %v990, %v1038
        %v1040 = vpop.f32.mrf.mxu0
        %v1041 = vadd.f32 %v992, %v1040
        %1042 = vmatmul.bf16.gmra.mxu0 %v754
        %v1043 = vpop.f32.mrf.mxu0
        %v1044 = vadd.f32 %v995, %v1043
        %v1045 = vpop.f32.mrf.mxu0
        %v1046 = vadd.f32 %v997, %v1045
        %1047 = vmatmul.bf16.gmra.mxu0 %v756
        %v1048 = vpop.f32.mrf.mxu0
        %v1049 = vadd.f32 %v1000, %v1048
        %v1050 = vpop.f32.mrf.mxu0
        %v1051 = vadd.f32 %v1002, %v1050
        %1052 = vdwg.mxu0
        %1053 = vmatpush.bf16.msra.mxu0 %v906
        %1054 = vmatpush.bf16.msra.mxu0 %v904
        %1055 = vmatpush.bf16.msra.mxu0 %v902
        %1056 = vmatpush.bf16.msra.mxu0 %v900
        %1057 = vmatpush.bf16.msra.mxu0 %v898
        %1058 = vmatpush.bf16.msra.mxu0 %v896
        %1059 = vmatpush.bf16.msra.mxu0 %v894
        %1060 = vmatpush.bf16.msra.mxu0 %v892
        %1061 = vmatmul.bf16.gmra.mxu0 %v741
        %v1062 = vpop.f32.mrf.mxu0
        %v1063 = vadd.f32 %v792, %v1062
        %v1064 = vpop.f32.mrf.mxu0
        %v1065 = vadd.f32 %v792, %v1064
        %1066 = vmatmul.bf16.gmra.mxu0 %v743
        %v1067 = vpop.f32.mrf.mxu0
        %v1068 = vadd.f32 %v792, %v1067
        %v1069 = vpop.f32.mrf.mxu0
        %v1070 = vadd.f32 %v792, %v1069
        %1071 = vmatmul.bf16.gmra.mxu0 %v745
        %v1072 = vpop.f32.mrf.mxu0
        %v1073 = vadd.f32 %v792, %v1072
        %v1074 = vpop.f32.mrf.mxu0
        %v1075 = vadd.f32 %v792, %v1074
        %1076 = vmatmul.bf16.gmra.mxu0 %v747
        %v1077 = vpop.f32.mrf.mxu0
        %v1078 = vadd.f32 %v792, %v1077
        %v1079 = vpop.f32.mrf.mxu0
        %v1080 = vadd.f32 %v792, %v1079
        %1081 = vmatmul.bf16.gmra.mxu0 %v749
        %v1082 = vpop.f32.mrf.mxu0
        %v1083 = vadd.f32 %v792, %v1082
        %v1084 = vpop.f32.mrf.mxu0
        %v1085 = vadd.f32 %v792, %v1084
        %1086 = vmatmul.bf16.gmra.mxu0 %v751
        %v1087 = vpop.f32.mrf.mxu0
        %v1088 = vadd.f32 %v792, %v1087
        %v1089 = vpop.f32.mrf.mxu0
        %v1090 = vadd.f32 %v792, %v1089
        %1091 = vmatmul.bf16.gmra.mxu0 %v753
        %v1092 = vpop.f32.mrf.mxu0
        %v1093 = vadd.f32 %v792, %v1092
        %v1094 = vpop.f32.mrf.mxu0
        %v1095 = vadd.f32 %v792, %v1094
        %1096 = vmatmul.bf16.gmra.mxu0 %v755
        %v1097 = vpop.f32.mrf.mxu0
        %v1098 = vadd.f32 %v792, %v1097
        %v1099 = vpop.f32.mrf.mxu0
        %v1100 = vadd.f32 %v792, %v1099
        %1101 = vdwg.mxu0
        %1102 = vmatpush.bf16.msra.mxu0 %v922
        %1103 = vmatpush.bf16.msra.mxu0 %v920
        %1104 = vmatpush.bf16.msra.mxu0 %v918
        %1105 = vmatpush.bf16.msra.mxu0 %v916
        %1106 = vmatpush.bf16.msra.mxu0 %v914
        %1107 = vmatpush.bf16.msra.mxu0 %v912
        %1108 = vmatpush.bf16.msra.mxu0 %v910
        %1109 = vmatpush.bf16.msra.mxu0 %v908
        %1110 = vmatmul.bf16.gmra.mxu0 %v742
        %v1111 = vpop.f32.mrf.mxu0
        %v1112 = vadd.f32 %v1063, %v1111
        %v1113 = vpop.f32.mrf.mxu0
        %v1114 = vadd.f32 %v1065, %v1113
        %1115 = vmatmul.bf16.gmra.mxu0 %v744
        %v1116 = vpop.f32.mrf.mxu0
        %v1117 = vadd.f32 %v1068, %v1116
        %v1118 = vpop.f32.mrf.mxu0
        %v1119 = vadd.f32 %v1070, %v1118
        %1120 = vmatmul.bf16.gmra.mxu0 %v746
        %v1121 = vpop.f32.mrf.mxu0
        %v1122 = vadd.f32 %v1073, %v1121
        %v1123 = vpop.f32.mrf.mxu0
        %v1124 = vadd.f32 %v1075, %v1123
        %1125 = vmatmul.bf16.gmra.mxu0 %v748
        %v1126 = vpop.f32.mrf.mxu0
        %v1127 = vadd.f32 %v1078, %v1126
        %v1128 = vpop.f32.mrf.mxu0
        %v1129 = vadd.f32 %v1080, %v1128
        %1130 = vmatmul.bf16.gmra.mxu0 %v750
        %v1131 = vpop.f32.mrf.mxu0
        %v1132 = vadd.f32 %v1083, %v1131
        %v1133 = vpop.f32.mrf.mxu0
        %v1134 = vadd.f32 %v1085, %v1133
        %1135 = vmatmul.bf16.gmra.mxu0 %v752
        %v1136 = vpop.f32.mrf.mxu0
        %v1137 = vadd.f32 %v1088, %v1136
        %v1138 = vpop.f32.mrf.mxu0
        %v1139 = vadd.f32 %v1090, %v1138
        %1140 = vmatmul.bf16.gmra.mxu0 %v754
        %v1141 = vpop.f32.mrf.mxu0
        %v1142 = vadd.f32 %v1093, %v1141
        %v1143 = vpop.f32.mrf.mxu0
        %v1144 = vadd.f32 %v1095, %v1143
        %1145 = vmatmul.bf16.gmra.mxu0 %v756
        %v1146 = vpop.f32.mrf.mxu0
        %v1147 = vadd.f32 %v1098, %v1146
        %v1148 = vpop.f32.mrf.mxu0
        %v1149 = vadd.f32 %v1100, %v1148
        %1150 = vdwg.mxu0
        %vm1151 = vcmp.ge.f32.partialorder %v1014, 0.0
        %vm1152 = vcmp.ge.f32.partialorder %v1112, 0.0
        %vm1153 = vcmp.ge.f32.partialorder %v1016, 0.0
        %vm1154 = vcmp.ge.f32.partialorder %v1114, 0.0
        %vm1155 = vcmp.ge.f32.partialorder %v1019, 0.0
        %vm1156 = vcmp.ge.f32.partialorder %v1117, 0.0
        %vm1157 = vcmp.ge.f32.partialorder %v1021, 0.0
        %vm1158 = vcmp.ge.f32.partialorder %v1119, 0.0
        %vm1159 = vcmp.ge.f32.partialorder %v1024, 0.0
        %vm1160 = vcmp.ge.f32.partialorder %v1122, 0.0
        %vm1161 = vcmp.ge.f32.partialorder %v1026, 0.0
        %vm1162 = vcmp.ge.f32.partialorder %v1124, 0.0
        %vm1163 = vcmp.ge.f32.partialorder %v1029, 0.0
        %vm1164 = vcmp.ge.f32.partialorder %v1127, 0.0
        %vm1165 = vcmp.ge.f32.partialorder %v1031, 0.0
        %vm1166 = vcmp.ge.f32.partialorder %v1129, 0.0
        %vm1167 = vcmp.ge.f32.partialorder %v1034, 0.0
        %vm1168 = vcmp.ge.f32.partialorder %v1132, 0.0
        %vm1169 = vcmp.ge.f32.partialorder %v1036, 0.0
        %vm1170 = vcmp.ge.f32.partialorder %v1134, 0.0
        %vm1171 = vcmp.ge.f32.partialorder %v1039, 0.0
        %vm1172 = vcmp.ge.f32.partialorder %v1137, 0.0
        %vm1173 = vcmp.ge.f32.partialorder %v1041, 0.0
        %vm1174 = vcmp.ge.f32.partialorder %v1139, 0.0
        %vm1175 = vcmp.ge.f32.partialorder %v1044, 0.0
        %vm1176 = vcmp.ge.f32.partialorder %v1142, 0.0
        %vm1177 = vcmp.ge.f32.partialorder %v1046, 0.0
        %vm1178 = vcmp.ge.f32.partialorder %v1144, 0.0
        %vm1179 = vcmp.ge.f32.partialorder %v1049, 0.0
        %vm1180 = vcmp.ge.f32.partialorder %v1147, 0.0
        %vm1181 = vcmp.ge.f32.partialorder %v1051, 0.0
        %vm1182 = vcmp.ge.f32.partialorder %v1149, 0.0
        %v1183 = vmul.f32 %v1014, 0.01
        %v1184 = vmul.f32 %v1112, 0.01
        %v1185 = vmul.f32 %v1016, 0.01
        %v1186 = vmul.f32 %v1114, 0.01
        %v1187 = vmul.f32 %v1019, 0.01
        %v1188 = vmul.f32 %v1117, 0.01
        %v1189 = vmul.f32 %v1021, 0.01
        %v1190 = vmul.f32 %v1119, 0.01
        %v1191 = vmul.f32 %v1024, 0.01
        %v1192 = vmul.f32 %v1122, 0.01
        %v1193 = vmul.f32 %v1026, 0.01
        %v1194 = vmul.f32 %v1124, 0.01
        %v1195 = vmul.f32 %v1029, 0.01
        %v1196 = vmul.f32 %v1127, 0.01
        %v1197 = vmul.f32 %v1031, 0.01
        %v1198 = vmul.f32 %v1129, 0.01
        %v1199 = vmul.f32 %v1034, 0.01
        %v1200 = vmul.f32 %v1132, 0.01
        %v1201 = vmul.f32 %v1036, 0.01
        %v1202 = vmul.f32 %v1134, 0.01
        %v1203 = vmul.f32 %v1039, 0.01
        %v1204 = vmul.f32 %v1137, 0.01
        %v1205 = vmul.f32 %v1041, 0.01
        %v1206 = vmul.f32 %v1139, 0.01
        %v1207 = vmul.f32 %v1044, 0.01
        %v1208 = vmul.f32 %v1142, 0.01
        %v1209 = vmul.f32 %v1046, 0.01
        %v1210 = vmul.f32 %v1144, 0.01
        %v1211 = vmul.f32 %v1049, 0.01
        %v1212 = vmul.f32 %v1147, 0.01
        %v1213 = vmul.f32 %v1051, 0.01
        %v1214 = vmul.f32 %v1149, 0.01
        %v1215 = vsel %vm1151, %v1014, %v1183
        %v1216 = vsel %vm1152, %v1112, %v1184
        %v1217 = vsel %vm1153, %v1016, %v1185
        %v1218 = vsel %vm1154, %v1114, %v1186
        %v1219 = vsel %vm1155, %v1019, %v1187
        %v1220 = vsel %vm1156, %v1117, %v1188
        %v1221 = vsel %vm1157, %v1021, %v1189
        %v1222 = vsel %vm1158, %v1119, %v1190
        %v1223 = vsel %vm1159, %v1024, %v1191
        %v1224 = vsel %vm1160, %v1122, %v1192
        %v1225 = vsel %vm1161, %v1026, %v1193
        %v1226 = vsel %vm1162, %v1124, %v1194
        %v1227 = vsel %vm1163, %v1029, %v1195
        %v1228 = vsel %vm1164, %v1127, %v1196
        %v1229 = vsel %vm1165, %v1031, %v1197
        %v1230 = vsel %vm1166, %v1129, %v1198
        %v1231 = vsel %vm1167, %v1034, %v1199
        %v1232 = vsel %vm1168, %v1132, %v1200
        %v1233 = vsel %vm1169, %v1036, %v1201
        %v1234 = vsel %vm1170, %v1134, %v1202
        %v1235 = vsel %vm1171, %v1039, %v1203
        %v1236 = vsel %vm1172, %v1137, %v1204
        %v1237 = vsel %vm1173, %v1041, %v1205
        %v1238 = vsel %vm1174, %v1139, %v1206
        %v1239 = vsel %vm1175, %v1044, %v1207
        %v1240 = vsel %vm1176, %v1142, %v1208
        %v1241 = vsel %vm1177, %v1046, %v1209
        %v1242 = vsel %vm1178, %v1144, %v1210
        %v1243 = vsel %vm1179, %v1049, %v1211
        %v1244 = vsel %vm1180, %v1147, %v1212
        %v1245 = vsel %vm1181, %v1051, %v1213
        %v1246 = vsel %vm1182, %v1149, %v1214
        %v1247 = vpack.c.bf16 %v1217, %v1215
        %v1248 = vpack.c.bf16 %v1218, %v1216
        %v1249 = vpack.c.bf16 %v1221, %v1219
        %v1250 = vpack.c.bf16 %v1222, %v1220
        %v1251 = vpack.c.bf16 %v1225, %v1223
        %v1252 = vpack.c.bf16 %v1226, %v1224
        %v1253 = vpack.c.bf16 %v1229, %v1227
        %v1254 = vpack.c.bf16 %v1230, %v1228
        %v1255 = vpack.c.bf16 %v1233, %v1231
        %v1256 = vpack.c.bf16 %v1234, %v1232
        %v1257 = vpack.c.bf16 %v1237, %v1235
        %v1258 = vpack.c.bf16 %v1238, %v1236
        %v1259 = vpack.c.bf16 %v1241, %v1239
        %v1260 = vpack.c.bf16 %v1242, %v1240
        %v1261 = vpack.c.bf16 %v1245, %v1243
        %v1262 = vpack.c.bf16 %v1246, %v1244
        %v1263 = vld [vmem:[#allocation11] sm:$0xf]
        %v1264 = vld [vmem:[#allocation11 + $0x4] sm:$0xf]
        %v1265 = vld [vmem:[#allocation11 + $0x8] sm:$0xf]
        %v1266 = vld [vmem:[#allocation11 + $0xc] sm:$0xf]
        %v1267 = vld [vmem:[#allocation11 + $0x10] sm:$0xf]
        %v1268 = vld [vmem:[#allocation11 + $0x14] sm:$0xf]
        %v1269 = vld [vmem:[#allocation11 + $0x18] sm:$0xf]
        %v1270 = vld [vmem:[#allocation11 + $0x1c] sm:$0xf]
        %v1271 = vld [vmem:[#allocation11 + $0x20] sm:$0xf]
        %v1272 = vld [vmem:[#allocation11 + $0x24] sm:$0xf]
        %v1273 = vld [vmem:[#allocation11 + $0x28] sm:$0xf]
        %v1274 = vld [vmem:[#allocation11 + $0x2c] sm:$0xf]
        %v1275 = vld [vmem:[#allocation11 + $0x30] sm:$0xf]
        %v1276 = vld [vmem:[#allocation11 + $0x34] sm:$0xf]
        %v1277 = vld [vmem:[#allocation11 + $0x38] sm:$0xf]
        %v1278 = vld [vmem:[#allocation11 + $0x3c] sm:$0xf]
        %v1279 = vld [vmem:[#allocation11 + $0x40] sm:$0xf]
        %v1280 = vld [vmem:[#allocation11 + $0x44] sm:$0xf]
        %v1281 = vld [vmem:[#allocation11 + $0x48] sm:$0xf]
        %v1282 = vld [vmem:[#allocation11 + $0x4c] sm:$0xf]
        %v1283 = vld [vmem:[#allocation11 + $0x50] sm:$0xf]
        %v1284 = vld [vmem:[#allocation11 + $0x54] sm:$0xf]
        %v1285 = vld [vmem:[#allocation11 + $0x58] sm:$0xf]
        %v1286 = vld [vmem:[#allocation11 + $0x5c] sm:$0xf]
        %v1287 = vld [vmem:[#allocation11 + $0x60] sm:$0xf]
        %v1288 = vld [vmem:[#allocation11 + $0x64] sm:$0xf]
        %v1289 = vld [vmem:[#allocation11 + $0x68] sm:$0xf]
        %v1290 = vld [vmem:[#allocation11 + $0x6c] sm:$0xf]
        %v1291 = vld [vmem:[#allocation11 + $0x70] sm:$0xf]
        %v1292 = vld [vmem:[#allocation11 + $0x74] sm:$0xf]
        %v1293 = vld [vmem:[#allocation11 + $0x78] sm:$0xf]
        %v1294 = vld [vmem:[#allocation11 + $0x7c] sm:$0xf]
        %v1295 = vld [vmem:[%s6] sm:$0x1]
        %v1297 = vperm.slane %v1295, 0
        %v1331 = vunpack.c.l.b16 %v1263
        %v1332 = vunpack.c.l.b16 %v1264
        %v1333 = vunpack.c.l.b16 %v1265
        %v1334 = vunpack.c.l.b16 %v1266
        %v1335 = vunpack.c.l.b16 %v1267
        %v1336 = vunpack.c.l.b16 %v1268
        %v1337 = vunpack.c.l.b16 %v1269
        %v1338 = vunpack.c.l.b16 %v1270
        %v1339 = vunpack.c.l.b16 %v1271
        %v1340 = vunpack.c.l.b16 %v1272
        %v1341 = vunpack.c.l.b16 %v1273
        %v1342 = vunpack.c.l.b16 %v1274
        %v1343 = vunpack.c.l.b16 %v1275
        %v1344 = vunpack.c.l.b16 %v1276
        %v1345 = vunpack.c.l.b16 %v1277
        %v1346 = vunpack.c.l.b16 %v1278
        %v1347 = vunpack.c.l.b16 %v1279
        %v1348 = vunpack.c.l.b16 %v1280
        %v1349 = vunpack.c.l.b16 %v1281
        %v1350 = vunpack.c.l.b16 %v1282
        %v1351 = vunpack.c.l.b16 %v1283
        %v1352 = vunpack.c.l.b16 %v1284
        %v1353 = vunpack.c.l.b16 %v1285
        %v1354 = vunpack.c.l.b16 %v1286
        %v1355 = vunpack.c.l.b16 %v1287
        %v1356 = vunpack.c.l.b16 %v1288
        %v1357 = vunpack.c.l.b16 %v1289
        %v1358 = vunpack.c.l.b16 %v1290
        %v1359 = vunpack.c.l.b16 %v1291
        %v1360 = vunpack.c.l.b16 %v1292
        %v1361 = vunpack.c.l.b16 %v1293
        %v1362 = vunpack.c.l.b16 %v1294
        %v1363 = vpack.c.b16 %v1332, %v1331
        %v1364 = vpack.c.b16 %v1334, %v1333
        %v1365 = vpack.c.b16 %v1336, %v1335
        %v1366 = vpack.c.b16 %v1338, %v1337
        %v1367 = vpack.c.b16 %v1340, %v1339
        %v1368 = vpack.c.b16 %v1342, %v1341
        %v1369 = vpack.c.b16 %v1344, %v1343
        %v1370 = vpack.c.b16 %v1346, %v1345
        %v1371 = vpack.c.b16 %v1348, %v1347
        %v1372 = vpack.c.b16 %v1350, %v1349
        %v1373 = vpack.c.b16 %v1352, %v1351
        %v1374 = vpack.c.b16 %v1354, %v1353
        %v1375 = vpack.c.b16 %v1356, %v1355
        %v1376 = vpack.c.b16 %v1358, %v1357
        %v1377 = vpack.c.b16 %v1360, %v1359
        %v1378 = vpack.c.b16 %v1362, %v1361
        %1395 = vmatpush.bf16.msra.mxu0 %v1370
        %1396 = vmatpush.bf16.msra.mxu0 %v1369
        %1397 = vmatpush.bf16.msra.mxu0 %v1368
        %1398 = vmatpush.bf16.msra.mxu0 %v1367
        %1399 = vmatpush.bf16.msra.mxu0 %v1366
        %1400 = vmatpush.bf16.msra.mxu0 %v1365
        %1401 = vmatpush.bf16.msra.mxu0 %v1364
        %1402 = vmatpush.bf16.msra.mxu0 %v1363
        %1403 = vmatmul.bf16.gmra.mxu0 %v1247
        %v1404 = vpop.f32.mrf.mxu0
        %v1405 = vadd.f32 %v1297, %v1404
        %v1406 = vpop.f32.mrf.mxu0
        %v1407 = vadd.f32 %v1297, %v1406
        %1408 = vmatmul.bf16.gmra.mxu0 %v1249
        %v1409 = vpop.f32.mrf.mxu0
        %v1410 = vadd.f32 %v1297, %v1409
        %v1411 = vpop.f32.mrf.mxu0
        %v1412 = vadd.f32 %v1297, %v1411
        %1413 = vmatmul.bf16.gmra.mxu0 %v1251
        %v1414 = vpop.f32.mrf.mxu0
        %v1415 = vadd.f32 %v1297, %v1414
        %v1416 = vpop.f32.mrf.mxu0
        %v1417 = vadd.f32 %v1297, %v1416
        %1418 = vmatmul.bf16.gmra.mxu0 %v1253
        %v1419 = vpop.f32.mrf.mxu0
        %v1420 = vadd.f32 %v1297, %v1419
        %v1421 = vpop.f32.mrf.mxu0
        %v1422 = vadd.f32 %v1297, %v1421
        %1423 = vmatmul.bf16.gmra.mxu0 %v1255
        %v1424 = vpop.f32.mrf.mxu0
        %v1425 = vadd.f32 %v1297, %v1424
        %v1426 = vpop.f32.mrf.mxu0
        %v1427 = vadd.f32 %v1297, %v1426
        %1428 = vmatmul.bf16.gmra.mxu0 %v1257
        %v1429 = vpop.f32.mrf.mxu0
        %v1430 = vadd.f32 %v1297, %v1429
        %v1431 = vpop.f32.mrf.mxu0
        %v1432 = vadd.f32 %v1297, %v1431
        %1433 = vmatmul.bf16.gmra.mxu0 %v1259
        %v1434 = vpop.f32.mrf.mxu0
        %v1435 = vadd.f32 %v1297, %v1434
        %v1436 = vpop.f32.mrf.mxu0
        %v1437 = vadd.f32 %v1297, %v1436
        %1438 = vmatmul.bf16.gmra.mxu0 %v1261
        %v1439 = vpop.f32.mrf.mxu0
        %v1440 = vadd.f32 %v1297, %v1439
        %v1441 = vpop.f32.mrf.mxu0
        %v1442 = vadd.f32 %v1297, %v1441
        %1443 = vdwg.mxu0
        %1444 = vmatpush.bf16.msra.mxu0 %v1378
        %1445 = vmatpush.bf16.msra.mxu0 %v1377
        %1446 = vmatpush.bf16.msra.mxu0 %v1376
        %1447 = vmatpush.bf16.msra.mxu0 %v1375
        %1448 = vmatpush.bf16.msra.mxu0 %v1374
        %1449 = vmatpush.bf16.msra.mxu0 %v1373
        %1450 = vmatpush.bf16.msra.mxu0 %v1372
        %1451 = vmatpush.bf16.msra.mxu0 %v1371
        %1452 = vmatmul.bf16.gmra.mxu0 %v1248
        %v1453 = vpop.f32.mrf.mxu0
        %v1454 = vadd.f32 %v1405, %v1453
        %v1455 = vpop.f32.mrf.mxu0
        %v1456 = vadd.f32 %v1407, %v1455
        %1457 = vmatmul.bf16.gmra.mxu0 %v1250
        %v1458 = vpop.f32.mrf.mxu0
        %v1459 = vadd.f32 %v1410, %v1458
        %v1460 = vpop.f32.mrf.mxu0
        %v1461 = vadd.f32 %v1412, %v1460
        %1462 = vmatmul.bf16.gmra.mxu0 %v1252
        %v1463 = vpop.f32.mrf.mxu0
        %v1464 = vadd.f32 %v1415, %v1463
        %v1465 = vpop.f32.mrf.mxu0
        %v1466 = vadd.f32 %v1417, %v1465
        %1467 = vmatmul.bf16.gmra.mxu0 %v1254
        %v1468 = vpop.f32.mrf.mxu0
        %v1469 = vadd.f32 %v1420, %v1468
        %v1470 = vpop.f32.mrf.mxu0
        %v1471 = vadd.f32 %v1422, %v1470
        %1472 = vmatmul.bf16.gmra.mxu0 %v1256
        %v1473 = vpop.f32.mrf.mxu0
        %v1474 = vadd.f32 %v1425, %v1473
        %v1475 = vpop.f32.mrf.mxu0
        %v1476 = vadd.f32 %v1427, %v1475
        %1477 = vmatmul.bf16.gmra.mxu0 %v1258
        %v1478 = vpop.f32.mrf.mxu0
        %v1479 = vadd.f32 %v1430, %v1478
        %v1480 = vpop.f32.mrf.mxu0
        %v1481 = vadd.f32 %v1432, %v1480
        %1482 = vmatmul.bf16.gmra.mxu0 %v1260
        %v1483 = vpop.f32.mrf.mxu0
        %v1484 = vadd.f32 %v1435, %v1483
        %v1485 = vpop.f32.mrf.mxu0
        %v1486 = vadd.f32 %v1437, %v1485
        %1487 = vmatmul.bf16.gmra.mxu0 %v1262
        %v1488 = vpop.f32.mrf.mxu0
        %v1489 = vadd.f32 %v1440, %v1488
        %v1490 = vpop.f32.mrf.mxu0
        %v1491 = vadd.f32 %v1442, %v1490
        %1492 = vdwg.mxu0
        %v1493 = vmul.f32 %v1454, %v1454
        %v1494 = vmul.f32 %v1456, %v1456
        %v1495 = vmul.f32 %v1459, %v1459
        %v1496 = vmul.f32 %v1461, %v1461
        %v1497 = vmul.f32 %v1464, %v1464
        %v1498 = vmul.f32 %v1466, %v1466
        %v1499 = vmul.f32 %v1469, %v1469
        %v1500 = vmul.f32 %v1471, %v1471
        %v1501 = vmul.f32 %v1474, %v1474
        %v1502 = vmul.f32 %v1476, %v1476
        %v1503 = vmul.f32 %v1479, %v1479
        %v1504 = vmul.f32 %v1481, %v1481
        %v1505 = vmul.f32 %v1484, %v1484
        %v1506 = vmul.f32 %v1486, %v1486
        %v1507 = vmul.f32 %v1489, %v1489
        %v1508 = vmul.f32 %v1491, %v1491
        %1509 = vadd.xlane.f32.xlu0 %v1493
        %v1510 = vpop.xlane.xlu0 %1509
        %1511 = vadd.xlane.f32.xlu0 %v1494
        %v1512 = vpop.xlane.xlu0 %1511
        %1513 = vadd.xlane.f32.xlu0 %v1495
        %v1514 = vpop.xlane.xlu0 %1513
        %1515 = vadd.xlane.f32.xlu0 %v1496
        %v1516 = vpop.xlane.xlu0 %1515
        %1517 = vadd.xlane.f32.xlu0 %v1497
        %v1518 = vpop.xlane.xlu0 %1517
        %1519 = vadd.xlane.f32.xlu0 %v1498
        %v1520 = vpop.xlane.xlu0 %1519
        %1521 = vadd.xlane.f32.xlu0 %v1499
        %v1522 = vpop.xlane.xlu0 %1521
        %1523 = vadd.xlane.f32.xlu0 %v1500
        %v1524 = vpop.xlane.xlu0 %1523
        %1525 = vadd.xlane.f32.xlu0 %v1501
        %v1526 = vpop.xlane.xlu0 %1525
        %1527 = vadd.xlane.f32.xlu0 %v1502
        %v1528 = vpop.xlane.xlu0 %1527
        %1529 = vadd.xlane.f32.xlu0 %v1503
        %v1530 = vpop.xlane.xlu0 %1529
        %1531 = vadd.xlane.f32.xlu0 %v1504
        %v1532 = vpop.xlane.xlu0 %1531
        %1533 = vadd.xlane.f32.xlu0 %v1505
        %v1534 = vpop.xlane.xlu0 %1533
        %1535 = vadd.xlane.f32.xlu0 %v1506
        %v1536 = vpop.xlane.xlu0 %1535
        %1537 = vadd.xlane.f32.xlu0 %v1507
        %v1538 = vpop.xlane.xlu0 %1537
        %1539 = vadd.xlane.f32.xlu0 %v1508
        %v1540 = vpop.xlane.xlu0 %1539
        %v1541 = vmax.f32 %v1510, 1e-16
        %v1542 = vmax.f32 %v1512, 1e-16
        %v1543 = vmax.f32 %v1514, 1e-16
        %v1544 = vmax.f32 %v1516, 1e-16
        %v1545 = vmax.f32 %v1518, 1e-16
        %v1546 = vmax.f32 %v1520, 1e-16
        %v1547 = vmax.f32 %v1522, 1e-16
        %v1548 = vmax.f32 %v1524, 1e-16
        %v1549 = vmax.f32 %v1526, 1e-16
        %v1550 = vmax.f32 %v1528, 1e-16
        %v1551 = vmax.f32 %v1530, 1e-16
        %v1552 = vmax.f32 %v1532, 1e-16
        %v1553 = vmax.f32 %v1534, 1e-16
        %v1554 = vmax.f32 %v1536, 1e-16
        %v1555 = vmax.f32 %v1538, 1e-16
        %v1556 = vmax.f32 %v1540, 1e-16
        %v1557 = vrsqrt.pop %v1541
        %v1558 = vmul.f32 %v1557, %v1541
        %v1559 = vmul.f32 %v1558, %v1557
        %v1560 = vmul.f32 0.5, %v1559
        %v1561 = vsub.f32 1.5, %v1560
        %v1562 = vmul.f32 %v1557, %v1561
        %vm1563 = vweird.f32 %v1541
        %vm1564 = vweird.f32 %v1557
        %vm1565 = vmor %vm1563, %vm1564
        %v1566 = vsel %vm1565, %v1557, %v1562
        %v1567 = vrsqrt.pop %v1542
        %v1568 = vmul.f32 %v1567, %v1542
        %v1569 = vmul.f32 %v1568, %v1567
        %v1570 = vmul.f32 0.5, %v1569
        %v1571 = vsub.f32 1.5, %v1570
        %v1572 = vmul.f32 %v1567, %v1571
        %vm1573 = vweird.f32 %v1542
        %vm1574 = vweird.f32 %v1567
        %vm1575 = vmor %vm1573, %vm1574
        %v1576 = vsel %vm1575, %v1567, %v1572
        %v1577 = vrsqrt.pop %v1543
        %v1578 = vmul.f32 %v1577, %v1543
        %v1579 = vmul.f32 %v1578, %v1577
        %v1580 = vmul.f32 0.5, %v1579
        %v1581 = vsub.f32 1.5, %v1580
        %v1582 = vmul.f32 %v1577, %v1581
        %vm1583 = vweird.f32 %v1543
        %vm1584 = vweird.f32 %v1577
        %vm1585 = vmor %vm1583, %vm1584
        %v1586 = vsel %vm1585, %v1577, %v1582
        %v1587 = vrsqrt.pop %v1544
        %v1588 = vmul.f32 %v1587, %v1544
        %v1589 = vmul.f32 %v1588, %v1587
        %v1590 = vmul.f32 0.5, %v1589
        %v1591 = vsub.f32 1.5, %v1590
        %v1592 = vmul.f32 %v1587, %v1591
        %vm1593 = vweird.f32 %v1544
        %vm1594 = vweird.f32 %v1587
        %vm1595 = vmor %vm1593, %vm1594
        %v1596 = vsel %vm1595, %v1587, %v1592
        %v1597 = vrsqrt.pop %v1545
        %v1598 = vmul.f32 %v1597, %v1545
        %v1599 = vmul.f32 %v1598, %v1597
        %v1600 = vmul.f32 0.5, %v1599
        %v1601 = vsub.f32 1.5, %v1600
        %v1602 = vmul.f32 %v1597, %v1601
        %vm1603 = vweird.f32 %v1545
        %vm1604 = vweird.f32 %v1597
        %vm1605 = vmor %vm1603, %vm1604
        %v1606 = vsel %vm1605, %v1597, %v1602
        %v1607 = vrsqrt.pop %v1546
        %v1608 = vmul.f32 %v1607, %v1546
        %v1609 = vmul.f32 %v1608, %v1607
        %v1610 = vmul.f32 0.5, %v1609
        %v1611 = vsub.f32 1.5, %v1610
        %v1612 = vmul.f32 %v1607, %v1611
        %vm1613 = vweird.f32 %v1546
        %vm1614 = vweird.f32 %v1607
        %vm1615 = vmor %vm1613, %vm1614
        %v1616 = vsel %vm1615, %v1607, %v1612
        %v1617 = vrsqrt.pop %v1547
        %v1618 = vmul.f32 %v1617, %v1547
        %v1619 = vmul.f32 %v1618, %v1617
        %v1620 = vmul.f32 0.5, %v1619
        %v1621 = vsub.f32 1.5, %v1620
        %v1622 = vmul.f32 %v1617, %v1621
        %vm1623 = vweird.f32 %v1547
        %vm1624 = vweird.f32 %v1617
        %vm1625 = vmor %vm1623, %vm1624
        %v1626 = vsel %vm1625, %v1617, %v1622
        %v1627 = vrsqrt.pop %v1548
        %v1628 = vmul.f32 %v1627, %v1548
        %v1629 = vmul.f32 %v1628, %v1627
        %v1630 = vmul.f32 0.5, %v1629
        %v1631 = vsub.f32 1.5, %v1630
        %v1632 = vmul.f32 %v1627, %v1631
        %vm1633 = vweird.f32 %v1548
        %vm1634 = vweird.f32 %v1627
        %vm1635 = vmor %vm1633, %vm1634
        %v1636 = vsel %vm1635, %v1627, %v1632
        %v1637 = vrsqrt.pop %v1549
        %v1638 = vmul.f32 %v1637, %v1549
        %v1639 = vmul.f32 %v1638, %v1637
        %v1640 = vmul.f32 0.5, %v1639
        %v1641 = vsub.f32 1.5, %v1640
        %v1642 = vmul.f32 %v1637, %v1641
        %vm1643 = vweird.f32 %v1549
        %vm1644 = vweird.f32 %v1637
        %vm1645 = vmor %vm1643, %vm1644
        %v1646 = vsel %vm1645, %v1637, %v1642
        %v1647 = vrsqrt.pop %v1550
        %v1648 = vmul.f32 %v1647, %v1550
        %v1649 = vmul.f32 %v1648, %v1647
        %v1650 = vmul.f32 0.5, %v1649
        %v1651 = vsub.f32 1.5, %v1650
        %v1652 = vmul.f32 %v1647, %v1651
        %vm1653 = vweird.f32 %v1550
        %vm1654 = vweird.f32 %v1647
        %vm1655 = vmor %vm1653, %vm1654
        %v1656 = vsel %vm1655, %v1647, %v1652
        %v1657 = vrsqrt.pop %v1551
        %v1658 = vmul.f32 %v1657, %v1551
        %v1659 = vmul.f32 %v1658, %v1657
        %v1660 = vmul.f32 0.5, %v1659
        %v1661 = vsub.f32 1.5, %v1660
        %v1662 = vmul.f32 %v1657, %v1661
        %vm1663 = vweird.f32 %v1551
        %vm1664 = vweird.f32 %v1657
        %vm1665 = vmor %vm1663, %vm1664
        %v1666 = vsel %vm1665, %v1657, %v1662
        %v1667 = vrsqrt.pop %v1552
        %v1668 = vmul.f32 %v1667, %v1552
        %v1669 = vmul.f32 %v1668, %v1667
        %v1670 = vmul.f32 0.5, %v1669
        %v1671 = vsub.f32 1.5, %v1670
        %v1672 = vmul.f32 %v1667, %v1671
        %vm1673 = vweird.f32 %v1552
        %vm1674 = vweird.f32 %v1667
        %vm1675 = vmor %vm1673, %vm1674
        %v1676 = vsel %vm1675, %v1667, %v1672
        %v1677 = vrsqrt.pop %v1553
        %v1678 = vmul.f32 %v1677, %v1553
        %v1679 = vmul.f32 %v1678, %v1677
        %v1680 = vmul.f32 0.5, %v1679
        %v1681 = vsub.f32 1.5, %v1680
        %v1682 = vmul.f32 %v1677, %v1681
        %vm1683 = vweird.f32 %v1553
        %vm1684 = vweird.f32 %v1677
        %vm1685 = vmor %vm1683, %vm1684
        %v1686 = vsel %vm1685, %v1677, %v1682
        %v1687 = vrsqrt.pop %v1554
        %v1688 = vmul.f32 %v1687, %v1554
        %v1689 = vmul.f32 %v1688, %v1687
        %v1690 = vmul.f32 0.5, %v1689
        %v1691 = vsub.f32 1.5, %v1690
        %v1692 = vmul.f32 %v1687, %v1691
        %vm1693 = vweird.f32 %v1554
        %vm1694 = vweird.f32 %v1687
        %vm1695 = vmor %vm1693, %vm1694
        %v1696 = vsel %vm1695, %v1687, %v1692
        %v1697 = vrsqrt.pop %v1555
        %v1698 = vmul.f32 %v1697, %v1555
        %v1699 = vmul.f32 %v1698, %v1697
        %v1700 = vmul.f32 0.5, %v1699
        %v1701 = vsub.f32 1.5, %v1700
        %v1702 = vmul.f32 %v1697, %v1701
        %vm1703 = vweird.f32 %v1555
        %vm1704 = vweird.f32 %v1697
        %vm1705 = vmor %vm1703, %vm1704
        %v1706 = vsel %vm1705, %v1697, %v1702
        %v1707 = vrsqrt.pop %v1556
        %v1708 = vmul.f32 %v1707, %v1556
        %v1709 = vmul.f32 %v1708, %v1707
        %v1710 = vmul.f32 0.5, %v1709
        %v1711 = vsub.f32 1.5, %v1710
        %v1712 = vmul.f32 %v1707, %v1711
        %vm1713 = vweird.f32 %v1556
        %vm1714 = vweird.f32 %v1707
        %vm1715 = vmor %vm1713, %vm1714
        %v1716 = vsel %vm1715, %v1707, %v1712
        %v1717 = vmul.f32 %v1454, %v1566
        %v1718 = vmul.f32 %v1456, %v1576
        %v1719 = vmul.f32 %v1459, %v1586
        %v1720 = vmul.f32 %v1461, %v1596
        %v1721 = vmul.f32 %v1464, %v1606
        %v1722 = vmul.f32 %v1466, %v1616
        %v1723 = vmul.f32 %v1469, %v1626
        %v1724 = vmul.f32 %v1471, %v1636
        %v1725 = vmul.f32 %v1474, %v1646
        %v1726 = vmul.f32 %v1476, %v1656
        %v1727 = vmul.f32 %v1479, %v1666
        %v1728 = vmul.f32 %v1481, %v1676
        %v1729 = vmul.f32 %v1484, %v1686
        %v1730 = vmul.f32 %v1486, %v1696
        %v1731 = vmul.f32 %v1489, %v1706
        %v1732 = vmul.f32 %v1491, %v1716
        %p1733 = scmp.eq.s32.totalorder %s31, 0
        // Predicated region
        $region69: #{tpu_custom_call.1} parent=47 // pred_check
          %p1734 = pneg %p1733
        $region70: #{tpu_custom_call.1} parent=47 // pred_check_branch
          %1736 = sbr.rel (%p1734) target = $region72
        $region71: #{tpu_custom_call.1} parent=47 // pred_region
          %1737 = vst [vmem:[#allocation2] sm:$0xff] 0.0
          %1738 = vst [vmem:[#allocation2 + $0x8] sm:$0xff] 0.0
          %1739 = vst [vmem:[#allocation2 + $0x10] sm:$0xff] 0.0
          %1740 = vst [vmem:[#allocation2 + $0x18] sm:$0xff] 0.0
          %1741 = vst [vmem:[#allocation2 + $0x20] sm:$0xff] 0.0
          %1742 = vst [vmem:[#allocation2 + $0x28] sm:$0xff] 0.0
          %1743 = vst [vmem:[#allocation2 + $0x30] sm:$0xff] 0.0
          %1744 = vst [vmem:[#allocation2 + $0x38] sm:$0xff] 0.0
          %1745 = vst [vmem:[#allocation2 + $0x40] sm:$0xff] 0.0
          %1746 = vst [vmem:[#allocation2 + $0x48] sm:$0xff] 0.0
          %1747 = vst [vmem:[#allocation2 + $0x50] sm:$0xff] 0.0
          %1748 = vst [vmem:[#allocation2 + $0x58] sm:$0xff] 0.0
          %1749 = vst [vmem:[#allocation2 + $0x60] sm:$0xff] 0.0
          %1750 = vst [vmem:[#allocation2 + $0x68] sm:$0xff] 0.0
          %1751 = vst [vmem:[#allocation2 + $0x70] sm:$0xff] 0.0
          %1752 = vst [vmem:[#allocation2 + $0x78] sm:$0xff] 0.0
        $region72: #{tpu_custom_call.1} parent=47 // pred_fallthru
          _
        %v1753 = vld [vmem:[#allocation2] sm:$0xff]
        %v1754 = vld [vmem:[#allocation2 + $0x8] sm:$0xff]
        %v1755 = vld [vmem:[#allocation2 + $0x10] sm:$0xff]
        %v1756 = vld [vmem:[#allocation2 + $0x18] sm:$0xff]
        %v1757 = vld [vmem:[#allocation2 + $0x20] sm:$0xff]
        %v1758 = vld [vmem:[#allocation2 + $0x28] sm:$0xff]
        %v1759 = vld [vmem:[#allocation2 + $0x30] sm:$0xff]
        %v1760 = vld [vmem:[#allocation2 + $0x38] sm:$0xff]
        %v1761 = vld [vmem:[#allocation2 + $0x40] sm:$0xff]
        %v1762 = vld [vmem:[#allocation2 + $0x48] sm:$0xff]
        %v1763 = vld [vmem:[#allocation2 + $0x50] sm:$0xff]
        %v1764 = vld [vmem:[#allocation2 + $0x58] sm:$0xff]
        %v1765 = vld [vmem:[#allocation2 + $0x60] sm:$0xff]
        %v1766 = vld [vmem:[#allocation2 + $0x68] sm:$0xff]
        %v1767 = vld [vmem:[#allocation2 + $0x70] sm:$0xff]
        %v1768 = vld [vmem:[#allocation2 + $0x78] sm:$0xff]
        %v1769 = vadd.f32 %v1753, %v1717
        %v1770 = vadd.f32 %v1754, %v1718
        %v1771 = vadd.f32 %v1755, %v1719
        %v1772 = vadd.f32 %v1756, %v1720
        %v1773 = vadd.f32 %v1757, %v1721
        %v1774 = vadd.f32 %v1758, %v1722
        %v1775 = vadd.f32 %v1759, %v1723
        %v1776 = vadd.f32 %v1760, %v1724
        %v1777 = vadd.f32 %v1761, %v1725
        %v1778 = vadd.f32 %v1762, %v1726
        %v1779 = vadd.f32 %v1763, %v1727
        %v1780 = vadd.f32 %v1764, %v1728
        %v1781 = vadd.f32 %v1765, %v1729
        %v1782 = vadd.f32 %v1766, %v1730
        %v1783 = vadd.f32 %v1767, %v1731
        %v1784 = vadd.f32 %v1768, %v1732
        %1785 = vst [vmem:[#allocation2] sm:$0xff] %v1769
        %1786 = vst [vmem:[#allocation2 + $0x8] sm:$0xff] %v1770
        %1787 = vst [vmem:[#allocation2 + $0x10] sm:$0xff] %v1771
        %1788 = vst [vmem:[#allocation2 + $0x18] sm:$0xff] %v1772
        %1789 = vst [vmem:[#allocation2 + $0x20] sm:$0xff] %v1773
        %1790 = vst [vmem:[#allocation2 + $0x28] sm:$0xff] %v1774
        %1791 = vst [vmem:[#allocation2 + $0x30] sm:$0xff] %v1775
        %1792 = vst [vmem:[#allocation2 + $0x38] sm:$0xff] %v1776
        %1793 = vst [vmem:[#allocation2 + $0x40] sm:$0xff] %v1777
        %1794 = vst [vmem:[#allocation2 + $0x48] sm:$0xff] %v1778
        %1795 = vst [vmem:[#allocation2 + $0x50] sm:$0xff] %v1779
        %1796 = vst [vmem:[#allocation2 + $0x58] sm:$0xff] %v1780
        %1797 = vst [vmem:[#allocation2 + $0x60] sm:$0xff] %v1781
        %1798 = vst [vmem:[#allocation2 + $0x68] sm:$0xff] %v1782
        %1799 = vst [vmem:[#allocation2 + $0x70] sm:$0xff] %v1783
        %1800 = vst [vmem:[#allocation2 + $0x78] sm:$0xff] %v1784
        %p1801 = scmp.eq.s32.totalorder %s31, 1
        // Predicated region
        $region73: #{tpu_custom_call.1} parent=47 // pred_check
          %p1802 = pneg %p1801
        $region74: #{tpu_custom_call.1} parent=47 // pred_check_branch
          %1804 = sbr.rel (%p1802) target = $region76
        $region75: #{tpu_custom_call.1} parent=47 // pred_region
          %v1805 = vld [vmem:[#allocation2] sm:$0xff]
          %v1806 = vld [vmem:[#allocation2 + $0x8] sm:$0xff]
          %v1807 = vld [vmem:[#allocation2 + $0x10] sm:$0xff]
          %v1808 = vld [vmem:[#allocation2 + $0x18] sm:$0xff]
          %v1809 = vld [vmem:[#allocation2 + $0x20] sm:$0xff]
          %v1810 = vld [vmem:[#allocation2 + $0x28] sm:$0xff]
          %v1811 = vld [vmem:[#allocation2 + $0x30] sm:$0xff]
          %v1812 = vld [vmem:[#allocation2 + $0x38] sm:$0xff]
          %v1813 = vld [vmem:[#allocation2 + $0x40] sm:$0xff]
          %v1814 = vld [vmem:[#allocation2 + $0x48] sm:$0xff]
          %v1815 = vld [vmem:[#allocation2 + $0x50] sm:$0xff]
          %v1816 = vld [vmem:[#allocation2 + $0x58] sm:$0xff]
          %v1817 = vld [vmem:[#allocation2 + $0x60] sm:$0xff]
          %v1818 = vld [vmem:[#allocation2 + $0x68] sm:$0xff]
          %v1819 = vld [vmem:[#allocation2 + $0x70] sm:$0xff]
          %v1820 = vld [vmem:[#allocation2 + $0x78] sm:$0xff]
          %v1821 = vmul.f32 %v1805, %v1805
          %v1822 = vmul.f32 %v1806, %v1806
          %v1823 = vmul.f32 %v1807, %v1807
          %v1824 = vmul.f32 %v1808, %v1808
          %v1825 = vmul.f32 %v1809, %v1809
          %v1826 = vmul.f32 %v1810, %v1810
          %v1827 = vmul.f32 %v1811, %v1811
          %v1828 = vmul.f32 %v1812, %v1812
          %v1829 = vmul.f32 %v1813, %v1813
          %v1830 = vmul.f32 %v1814, %v1814
          %v1831 = vmul.f32 %v1815, %v1815
          %v1832 = vmul.f32 %v1816, %v1816
          %v1833 = vmul.f32 %v1817, %v1817
          %v1834 = vmul.f32 %v1818, %v1818
          %v1835 = vmul.f32 %v1819, %v1819
          %v1836 = vmul.f32 %v1820, %v1820
          %1837 = vadd.xlane.f32.xlu0 %v1821
          %v1838 = vpop.xlane.xlu0 %1837
          %1839 = vadd.xlane.f32.xlu0 %v1822
          %v1840 = vpop.xlane.xlu0 %1839
          %1841 = vadd.xlane.f32.xlu0 %v1823
          %v1842 = vpop.xlane.xlu0 %1841
          %1843 = vadd.xlane.f32.xlu0 %v1824
          %v1844 = vpop.xlane.xlu0 %1843
          %1845 = vadd.xlane.f32.xlu0 %v1825
          %v1846 = vpop.xlane.xlu0 %1845
          %1847 = vadd.xlane.f32.xlu0 %v1826
          %v1848 = vpop.xlane.xlu0 %1847
          %1849 = vadd.xlane.f32.xlu0 %v1827
          %v1850 = vpop.xlane.xlu0 %1849
          %1851 = vadd.xlane.f32.xlu0 %v1828
          %v1852 = vpop.xlane.xlu0 %1851
          %1853 = vadd.xlane.f32.xlu0 %v1829
          %v1854 = vpop.xlane.xlu0 %1853
          %1855 = vadd.xlane.f32.xlu0 %v1830
          %v1856 = vpop.xlane.xlu0 %1855
          %1857 = vadd.xlane.f32.xlu0 %v1831
          %v1858 = vpop.xlane.xlu0 %1857
          %1859 = vadd.xlane.f32.xlu0 %v1832
          %v1860 = vpop.xlane.xlu0 %1859
          %1861 = vadd.xlane.f32.xlu0 %v1833
          %v1862 = vpop.xlane.xlu0 %1861
          %1863 = vadd.xlane.f32.xlu0 %v1834
          %v1864 = vpop.xlane.xlu0 %1863
          %1865 = vadd.xlane.f32.xlu0 %v1835
          %v1866 = vpop.xlane.xlu0 %1865
          %1867 = vadd.xlane.f32.xlu0 %v1836
          %v1868 = vpop.xlane.xlu0 %1867
          %v1869 = vmax.f32 %v1838, 1e-16
          %v1870 = vmax.f32 %v1840, 1e-16
          %v1871 = vmax.f32 %v1842, 1e-16
          %v1872 = vmax.f32 %v1844, 1e-16
          %v1873 = vmax.f32 %v1846, 1e-16
          %v1874 = vmax.f32 %v1848, 1e-16
          %v1875 = vmax.f32 %v1850, 1e-16
          %v1876 = vmax.f32 %v1852, 1e-16
          %v1877 = vmax.f32 %v1854, 1e-16
          %v1878 = vmax.f32 %v1856, 1e-16
          %v1879 = vmax.f32 %v1858, 1e-16
          %v1880 = vmax.f32 %v1860, 1e-16
          %v1881 = vmax.f32 %v1862, 1e-16
          %v1882 = vmax.f32 %v1864, 1e-16
          %v1883 = vmax.f32 %v1866, 1e-16
          %v1884 = vmax.f32 %v1868, 1e-16
          %v1885 = vrsqrt.pop %v1869
          %v1886 = vmul.f32 %v1885, %v1869
          %v1887 = vmul.f32 %v1886, %v1885
          %v1888 = vmul.f32 0.5, %v1887
          %v1889 = vsub.f32 1.5, %v1888
          %v1890 = vmul.f32 %v1885, %v1889
          %vm1891 = vweird.f32 %v1869
          %vm1892 = vweird.f32 %v1885
          %vm1893 = vmor %vm1891, %vm1892
          %v1894 = vsel %vm1893, %v1885, %v1890
          %v1895 = vrsqrt.pop %v1870
          %v1896 = vmul.f32 %v1895, %v1870
          %v1897 = vmul.f32 %v1896, %v1895
          %v1898 = vmul.f32 0.5, %v1897
          %v1899 = vsub.f32 1.5, %v1898
          %v1900 = vmul.f32 %v1895, %v1899
          %vm1901 = vweird.f32 %v1870
          %vm1902 = vweird.f32 %v1895
          %vm1903 = vmor %vm1901, %vm1902
          %v1904 = vsel %vm1903, %v1895, %v1900
          %v1905 = vrsqrt.pop %v1871
          %v1906 = vmul.f32 %v1905, %v1871
          %v1907 = vmul.f32 %v1906, %v1905
          %v1908 = vmul.f32 0.5, %v1907
          %v1909 = vsub.f32 1.5, %v1908
          %v1910 = vmul.f32 %v1905, %v1909
          %vm1911 = vweird.f32 %v1871
          %vm1912 = vweird.f32 %v1905
          %vm1913 = vmor %vm1911, %vm1912
          %v1914 = vsel %vm1913, %v1905, %v1910
          %v1915 = vrsqrt.pop %v1872
          %v1916 = vmul.f32 %v1915, %v1872
          %v1917 = vmul.f32 %v1916, %v1915
          %v1918 = vmul.f32 0.5, %v1917
          %v1919 = vsub.f32 1.5, %v1918
          %v1920 = vmul.f32 %v1915, %v1919
          %vm1921 = vweird.f32 %v1872
          %vm1922 = vweird.f32 %v1915
          %vm1923 = vmor %vm1921, %vm1922
          %v1924 = vsel %vm1923, %v1915, %v1920
          %v1925 = vrsqrt.pop %v1873
          %v1926 = vmul.f32 %v1925, %v1873
          %v1927 = vmul.f32 %v1926, %v1925
          %v1928 = vmul.f32 0.5, %v1927
          %v1929 = vsub.f32 1.5, %v1928
          %v1930 = vmul.f32 %v1925, %v1929
          %vm1931 = vweird.f32 %v1873
          %vm1932 = vweird.f32 %v1925
          %vm1933 = vmor %vm1931, %vm1932
          %v1934 = vsel %vm1933, %v1925, %v1930
          %v1935 = vrsqrt.pop %v1874
          %v1936 = vmul.f32 %v1935, %v1874
          %v1937 = vmul.f32 %v1936, %v1935
          %v1938 = vmul.f32 0.5, %v1937
          %v1939 = vsub.f32 1.5, %v1938
          %v1940 = vmul.f32 %v1935, %v1939
          %vm1941 = vweird.f32 %v1874
          %vm1942 = vweird.f32 %v1935
          %vm1943 = vmor %vm1941, %vm1942
          %v1944 = vsel %vm1943, %v1935, %v1940
          %v1945 = vrsqrt.pop %v1875
          %v1946 = vmul.f32 %v1945, %v1875
          %v1947 = vmul.f32 %v1946, %v1945
          %v1948 = vmul.f32 0.5, %v1947
          %v1949 = vsub.f32 1.5, %v1948
          %v1950 = vmul.f32 %v1945, %v1949
          %vm1951 = vweird.f32 %v1875
          %vm1952 = vweird.f32 %v1945
          %vm1953 = vmor %vm1951, %vm1952
          %v1954 = vsel %vm1953, %v1945, %v1950
          %v1955 = vrsqrt.pop %v1876
          %v1956 = vmul.f32 %v1955, %v1876
          %v1957 = vmul.f32 %v1956, %v1955
          %v1958 = vmul.f32 0.5, %v1957
          %v1959 = vsub.f32 1.5, %v1958
          %v1960 = vmul.f32 %v1955, %v1959
          %vm1961 = vweird.f32 %v1876
          %vm1962 = vweird.f32 %v1955
          %vm1963 = vmor %vm1961, %vm1962
          %v1964 = vsel %vm1963, %v1955, %v1960
          %v1965 = vrsqrt.pop %v1877
          %v1966 = vmul.f32 %v1965, %v1877
          %v1967 = vmul.f32 %v1966, %v1965
          %v1968 = vmul.f32 0.5, %v1967
          %v1969 = vsub.f32 1.5, %v1968
          %v1970 = vmul.f32 %v1965, %v1969
          %vm1971 = vweird.f32 %v1877
          %vm1972 = vweird.f32 %v1965
          %vm1973 = vmor %vm1971, %vm1972
          %v1974 = vsel %vm1973, %v1965, %v1970
          %v1975 = vrsqrt.pop %v1878
          %v1976 = vmul.f32 %v1975, %v1878
          %v1977 = vmul.f32 %v1976, %v1975
          %v1978 = vmul.f32 0.5, %v1977
          %v1979 = vsub.f32 1.5, %v1978
          %v1980 = vmul.f32 %v1975, %v1979
          %vm1981 = vweird.f32 %v1878
          %vm1982 = vweird.f32 %v1975
          %vm1983 = vmor %vm1981, %vm1982
          %v1984 = vsel %vm1983, %v1975, %v1980
          %v1985 = vrsqrt.pop %v1879
          %v1986 = vmul.f32 %v1985, %v1879
          %v1987 = vmul.f32 %v1986, %v1985
          %v1988 = vmul.f32 0.5, %v1987
          %v1989 = vsub.f32 1.5, %v1988
          %v1990 = vmul.f32 %v1985, %v1989
          %vm1991 = vweird.f32 %v1879
          %vm1992 = vweird.f32 %v1985
          %vm1993 = vmor %vm1991, %vm1992
          %v1994 = vsel %vm1993, %v1985, %v1990
          %v1995 = vrsqrt.pop %v1880
          %v1996 = vmul.f32 %v1995, %v1880
          %v1997 = vmul.f32 %v1996, %v1995
          %v1998 = vmul.f32 0.5, %v1997
          %v1999 = vsub.f32 1.5, %v1998
          %v2000 = vmul.f32 %v1995, %v1999
          %vm2001 = vweird.f32 %v1880
          %vm2002 = vweird.f32 %v1995
          %vm2003 = vmor %vm2001, %vm2002
          %v2004 = vsel %vm2003, %v1995, %v2000
          %v2005 = vrsqrt.pop %v1881
          %v2006 = vmul.f32 %v2005, %v1881
          %v2007 = vmul.f32 %v2006, %v2005
          %v2008 = vmul.f32 0.5, %v2007
          %v2009 = vsub.f32 1.5, %v2008
          %v2010 = vmul.f32 %v2005, %v2009
          %vm2011 = vweird.f32 %v1881
          %vm2012 = vweird.f32 %v2005
          %vm2013 = vmor %vm2011, %vm2012
          %v2014 = vsel %vm2013, %v2005, %v2010
          %v2015 = vrsqrt.pop %v1882
          %v2016 = vmul.f32 %v2015, %v1882
          %v2017 = vmul.f32 %v2016, %v2015
          %v2018 = vmul.f32 0.5, %v2017
          %v2019 = vsub.f32 1.5, %v2018
          %v2020 = vmul.f32 %v2015, %v2019
          %vm2021 = vweird.f32 %v1882
          %vm2022 = vweird.f32 %v2015
          %vm2023 = vmor %vm2021, %vm2022
          %v2024 = vsel %vm2023, %v2015, %v2020
          %v2025 = vrsqrt.pop %v1883
          %v2026 = vmul.f32 %v2025, %v1883
          %v2027 = vmul.f32 %v2026, %v2025
          %v2028 = vmul.f32 0.5, %v2027
          %v2029 = vsub.f32 1.5, %v2028
          %v2030 = vmul.f32 %v2025, %v2029
          %vm2031 = vweird.f32 %v1883
          %vm2032 = vweird.f32 %v2025
          %vm2033 = vmor %vm2031, %vm2032
          %v2034 = vsel %vm2033, %v2025, %v2030
          %v2035 = vrsqrt.pop %v1884
          %v2036 = vmul.f32 %v2035, %v1884
          %v2037 = vmul.f32 %v2036, %v2035
          %v2038 = vmul.f32 0.5, %v2037
          %v2039 = vsub.f32 1.5, %v2038
          %v2040 = vmul.f32 %v2035, %v2039
          %vm2041 = vweird.f32 %v1884
          %vm2042 = vweird.f32 %v2035
          %vm2043 = vmor %vm2041, %vm2042
          %v2044 = vsel %vm2043, %v2035, %v2040
          %v2045 = vmul.f32 %v1805, %v1894
          %v2046 = vmul.f32 %v1806, %v1904
          %v2047 = vmul.f32 %v1807, %v1914
          %v2048 = vmul.f32 %v1808, %v1924
          %v2049 = vmul.f32 %v1809, %v1934
          %v2050 = vmul.f32 %v1810, %v1944
          %v2051 = vmul.f32 %v1811, %v1954
          %v2052 = vmul.f32 %v1812, %v1964
          %v2053 = vmul.f32 %v1813, %v1974
          %v2054 = vmul.f32 %v1814, %v1984
          %v2055 = vmul.f32 %v1815, %v1994
          %v2056 = vmul.f32 %v1816, %v2004
          %v2057 = vmul.f32 %v1817, %v2014
          %v2058 = vmul.f32 %v1818, %v2024
          %v2059 = vmul.f32 %v1819, %v2034
          %v2060 = vmul.f32 %v1820, %v2044
          %2061 = vst [vmem:[%s378] sm:$0xff] %v2045
          %2062 = vst [vmem:[%s378 + $0x8] sm:$0xff] %v2046
          %2063 = vst [vmem:[%s378 + $0x10] sm:$0xff] %v2047
          %2064 = vst [vmem:[%s378 + $0x18] sm:$0xff] %v2048
          %2065 = vst [vmem:[%s378 + $0x20] sm:$0xff] %v2049
          %2066 = vst [vmem:[%s378 + $0x28] sm:$0xff] %v2050
          %2067 = vst [vmem:[%s378 + $0x30] sm:$0xff] %v2051
          %2068 = vst [vmem:[%s378 + $0x38] sm:$0xff] %v2052
          %2069 = vst [vmem:[%s378 + $0x40] sm:$0xff] %v2053
          %2070 = vst [vmem:[%s378 + $0x48] sm:$0xff] %v2054
          %2071 = vst [vmem:[%s378 + $0x50] sm:$0xff] %v2055
          %2072 = vst [vmem:[%s378 + $0x58] sm:$0xff] %v2056
          %2073 = vst [vmem:[%s378 + $0x60] sm:$0xff] %v2057
          %2074 = vst [vmem:[%s378 + $0x68] sm:$0xff] %v2058
          %2075 = vst [vmem:[%s378 + $0x70] sm:$0xff] %v2059
          %2076 = vst [vmem:[%s378 + $0x78] sm:$0xff] %v2060
        $region76: #{tpu_custom_call.1} parent=47 // pred_fallthru
          _
        %s2077 = sand.u32 %s200, 1
        %s2078 = scalar_lea.sflag [#allocation5], %s2077
        %s2079 = sand.u32 %s200, 1
        %s2080 = smul.addr %s2079, 128
        %s2081 = scalar_lea.vmem [#allocation12], %s2080
        // Predicated region
        $region77: #{tpu_custom_call.1} parent=47 // pred_check
          %p2082 = pneg %p210
        $region78: #{tpu_custom_call.1} parent=47 // pred_check_branch
          %2084 = sbr.rel (%p2082) target = $region80
        $region79: #{tpu_custom_call.1} parent=47 // pred_region
          %s2085 = smul.u32 16, %s30
          %2087 = vsyncadd %s2078, 0
          %s2088 = smul.addr %s2085, 8
          %s2089 = scalar_lea.hbm %s7, %s2088
          %s2090 = sshll.u32 %s2081, 4
          %s2091 = int_to_ptr.vmem [resolvable:$true] %s2090
          %s2092 = sshll.u32 %s2089, 4
          %s2093 = int_to_ptr.hbm [resolvable:$true] %s2092
          %2098 = dma.vmem_to_hbm [thread:$0]  %s2091, 2048, %s2093, %s2078, 128, 128, 8
        $region80: #{tpu_custom_call.1} parent=47 // pred_fallthru
          _
      $region48: #{tpu_custom_call.1} parent=5 // pred_fallthru
        _
      %p2099 = scmp.le.s32.totalorder 2, %s21
      // Predicated region
      $region81: #{tpu_custom_call.1} parent=5 // pred_check
        %p2100 = pneg %p2099
      $region82: #{tpu_custom_call.1} parent=5 // pred_check_branch
        %2102 = sbr.rel (%p2100) target = $region84
      $region83: #{tpu_custom_call.1} parent=5 // pred_region
        %s2103 = ssub.s32 %s21, 2
        // Predicated region
        $region85: #{tpu_custom_call.1} parent=83 // pred_check
          %p2104 = pneg %p216
        $region86: #{tpu_custom_call.1} parent=83 // pred_check_branch
          %2106 = sbr.rel (%p2104) target = $region88
        $region87: #{tpu_custom_call.1} parent=83 // pred_region
          %s2107 = sand.u32 %s201, 1
          %s2108 = scalar_lea.sflag [#allocation5], %s2107
          %s2109 = sand.u32 %s201, 1
          %s2110 = smul.addr %s2109, 128
          %s2111 = scalar_lea.vmem [#allocation12], %s2110
          %2113 = dma.done %s2108, 2048
        $region88: #{tpu_custom_call.1} parent=83 // pred_fallthru
          _
      $region84: #{tpu_custom_call.1} parent=5 // pred_fallthru
        _
    $region6: #{tpu_custom_call.1} parent=1 // loop_footer
      %s25 = sadd.s32 1, %s21
    $region7: #{tpu_custom_call.1} parent=1 // loop_footer_branch
      %20 = sbr.rel target = $region3
    $region8: #{tpu_custom_call.1} parent=1 // loop_exit
      _
    %2114 = vsyncpa [#allocation4], 1
    %s2115 = scalar_lea.sflag [#allocation4], 1
    %2116 = vsyncpa %s2115, 1
    %2117 = vsyncpa [#allocation7], 1
    %2118 = vsyncpa [#allocation10], 1
    %2119 = vsyncpa [#allocation5], 1
    %s2120 = scalar_lea.sflag [#allocation5], 1
    %2121 = vsyncpa %s2120, 1

</llo_original>
